<compile_context>
chip_gen: v6e
topology: v6e:2x2x1
jax: 0.10.0
libtpu: 0.0.40
codegen_flags: <defaults>
</compile_context>

<pallas_src>
import functools

import jax
import jax.numpy as jnp
from jax.experimental import pallas as pl
from jax.experimental.pallas import tpu as pltpu

BN_EPS = 1e-5
# Generation-safe scoped-VMEM budget (v7x has only 64 MiB per TensorCore).
VMEM_LIMIT_BYTES = 48 * 1024 * 1024

_SMEM_SPEC = pl.BlockSpec(memory_space=pltpu.MemorySpace.SMEM)


def _round_up(x, m):
    return ((x + m - 1) // m) * m


# ----------------------------------------------------------------------------
# In-kernel helpers
# ----------------------------------------------------------------------------
def _dropout_keep_mask(shape, row_off, col_off, seed_u32, keep_prob):
    """Stateless keep mask from a cheap integer hash of the global element index.

    Pure 32-bit VPU ops (mul/xor/shift/compare): lowers on Mosaic TPU and in
    interpret mode, unlike pltpu.prng_*.  Depends only on (global row, global
    col, seed) so the mask is independent of the tiling.
    """
    row = (jax.lax.broadcasted_iota(jnp.int32, shape, 0) + row_off).astype(jnp.uint32)
    col = (jax.lax.broadcasted_iota(jnp.int32, shape, 1) + col_off).astype(jnp.uint32)
    x = row * jnp.uint32(0x9E3779B1) + col * jnp.uint32(0x85EBCA77) + seed_u32
    x = x ^ (x >> 16)
    x = x * jnp.uint32(0x7FEB352D)
    x = x ^ (x >> 15)
    x = x * jnp.uint32(0x846CA68B)
    x = x ^ (x >> 16)
    thresh = jnp.int32(min(int(keep_prob * 2147483648.0), 2147483647))
    return (x >> 1).astype(jnp.int32) < thresh


# ----------------------------------------------------------------------------
# Pallas kernels
# ----------------------------------------------------------------------------
def _mm_bn_act_kernel(*refs, relu, drop_p, has_res, m_axis, n_axis):
    """Fused conv-as-matmul: out = dropout(relu(A @ W * scale + bias [+ res])).

    K is never tiled, so there is no accumulator scratch and no pl.when.
    NOTE: pl.program_id is only ever called at the top level of the body
    (never inside pl.when / lax.cond) so the kernel lowers everywhere.
    """
    if has_res:
        seed_ref, a_ref, w_ref, scale_ref, bias_ref, res_ref, o_ref = refs
    else:
        seed_ref, a_ref, w_ref, scale_ref, bias_ref, o_ref = refs
        res_ref = None

    y = jnp.dot(a_ref[...], w_ref[...], preferred_element_type=jnp.float32)
    y = y * scale_ref[...] + bias_ref[...]
    if res_ref is not None:
        y = y + res_ref[...].astype(jnp.float32)
    if relu:
        y = jnp.maximum(y, 0.0)
    if drop_p > 0.0:
        tm, tn = o_ref.shape
        row_off = pl.program_id(m_axis) * tm
        col_off = pl.program_id(n_axis) * tn
        keep = _dropout_keep_mask((tm, tn), row_off, col_off,
                                  seed_ref[0].astype(jnp.uint32), 1.0 - drop_p)
        y = jnp.where(keep, y * jnp.float32(1.0 / (1.0 - drop_p)), 0.0)
    o_ref[...] = y.astype(o_ref.dtype)


def _maxpool_kernel(x00_ref, x01_ref, x10_ref, x11_ref, o_ref, *, oh, ow):
    """3x3 / stride-2 / pad-1 max pool from four (row,col)-parity planes.

    Only unit-stride shifted reads are needed inside the kernel; channels are
    lane-padded to 128 so every store is lane-dense.
    """
    def tap(ref, r0, c0):
        return ref[0, pl.ds(r0, oh), pl.ds(c0, ow), :]

    m = tap(x00_ref, 0, 0)
    for ref, r0, c0 in ((x01_ref, 0, 0), (x00_ref, 0, 1),
                        (x10_ref, 0, 0), (x11_ref, 0, 0), (x10_ref, 0, 1),
                        (x00_ref, 1, 0), (x01_ref, 1, 0), (x00_ref, 1, 1)):
        m = jnp.maximum(m, tap(ref, r0, c0))
    o_ref[0] = m


def _head_kernel(seed_ref, x_ref, w_ref, b_ref, o_ref, *, inv_hw, drop_p):
    """Fused adaptive-avg-pool + squeeze + dropout + Linear(2048,1) + sigmoid.

    Gridded over batch tiles so large batches never exceed VMEM.
    """
    feat = jnp.sum(x_ref[...].astype(jnp.float32), axis=1) * jnp.float32(inv_hw)
    if drop_p > 0.0:
        row_off = pl.program_id(0) * x_ref.shape[0]
        keep = _dropout_keep_mask(feat.shape, row_off, 0,
                                  seed_ref[0].astype(jnp.uint32), 1.0 - drop_p)
        feat = jnp.where(keep, feat * jnp.float32(1.0 / (1.0 - drop_p)), 0.0)
    y = jnp.dot(feat, w_ref[...], preferred_element_type=jnp.float32) + b_ref[...]
    o_ref[...] = 1.0 / (1.0 + jnp.exp(-y))


# ----------------------------------------------------------------------------
# Cached pallas_call builders (one Mosaic compile per distinct configuration)
# ----------------------------------------------------------------------------
@functools.lru_cache(maxsize=None)
def _build_mm_call(M, K, Nout, relu, drop_p, has_res):
    # Large tiles amortize per-grid-step overhead; K stays un-tiled (<= 4608
    # for ResNet-50).  No M padding: pl.cdiv grid + masked edge tiles.
    tm = 512 if M >= 512 else _round_up(M, 8)
    tn = min(512, Nout)          # Nout is already padded to a multiple of 128
    gm = pl.cdiv(M, tm)
    gn = Nout // tn

    # Keep the higher-traffic operand resident across the inner grid sweep:
    # with the M axis outermost the weight is re-DMA'd gm*gn times; with the
    # N axis outermost the activation is.  Pick the cheaper order per layer.
    if gm * Nout + M <= gn * M + Nout:
        grid, m_axis, n_axis = (gm, gn), 0, 1
    else:
        grid, m_axis, n_axis = (gn, gm), 1, 0

    def a_map(*g):
        return (g[m_axis], 0)

    def w_map(*g):
        return (0, g[n_axis])

    def o_map(*g):
        return (g[m_axis], g[n_axis])

    in_specs = [
        _SMEM_SPEC,                            # dropout seed
        pl.BlockSpec((tm, K), a_map),          # A  (im2col patches)
        pl.BlockSpec((K, tn), w_map),          # W  (folded weight)
        pl.BlockSpec((1, tn), w_map),          # BN scale
        pl.BlockSpec((1, tn), w_map),          # BN bias
    ]
    if has_res:
        in_specs.append(pl.BlockSpec((tm, tn), o_map))   # residual

    kern = functools.partial(_mm_bn_act_kernel, relu=relu, drop_p=float(drop_p),
                             has_res=has_res, m_axis=m_axis, n_axis=n_axis)
    return pl.pallas_call(
        kern,
        out_shape=jax.ShapeDtypeStruct((M, Nout), jnp.bfloat16),
        grid=grid,
        in_specs=in_specs,
        out_specs=pl.BlockSpec((tm, tn), o_map),
        compiler_params=pltpu.CompilerParams(
            dimension_semantics=("parallel", "parallel"),
            vmem_limit_bytes=VMEM_LIMIT_BYTES),
    )


@functools.lru_cache(maxsize=None)
def _build_maxpool_call(N, HG, WG, C, oh, ow):
    in_spec = pl.BlockSpec((1, HG, WG, C), lambda n: (n, 0, 0, 0))
    return pl.pallas_call(
        functools.partial(_maxpool_kernel, oh=oh, ow=ow),
        out_shape=jax.ShapeDtypeStruct((N, oh, ow, C), jnp.bfloat16),
        grid=(N,),
        in_specs=[in_spec, in_spec, in_spec, in_spec],
        out_specs=pl.BlockSpec((1, oh, ow, C), lambda n: (n, 0, 0, 0)),
        compiler_params=pltpu.CompilerParams(
            dimension_semantics=("parallel",),
            vmem_limit_bytes=VMEM_LIMIT_BYTES),
    )


@functools.lru_cache(maxsize=None)
def _build_head_call(N, HW, C, drop_p):
    bt = N if N <= 128 else 128
    grid = (pl.cdiv(N, bt),)
    kern = functools.partial(_head_kernel, inv_hw=1.0 / float(HW),
                             drop_p=float(drop_p))
    return pl.pallas_call(
        kern,
        out_shape=jax.ShapeDtypeStruct((N, 1), jnp.float32),
        grid=grid,
        in_specs=[_SMEM_SPEC,
                  pl.BlockSpec((bt, HW, C), lambda i: (i, 0, 0)),
                  pl.BlockSpec((C, 1), lambda i: (0, 0)),
                  pl.BlockSpec((1, 1), lambda i: (0, 0))],
        out_specs=pl.BlockSpec((bt, 1), lambda i: (i, 0)),
        compiler_params=pltpu.CompilerParams(
            dimension_semantics=("parallel",),
            vmem_limit_bytes=VMEM_LIMIT_BYTES),
    )


# ----------------------------------------------------------------------------
# Wrappers
# ----------------------------------------------------------------------------
def _seed_arr(seed):
    return jnp.asarray([int(seed) & 0x7FFFFFFF], jnp.int32)


def mm_bn_act(a, w, scale, bias, seed, *, relu, drop_p, residual=None):
    M, K = a.shape
    Nout = w.shape[1]
    call = _build_mm_call(M, K, Nout, bool(relu), float(drop_p),
                          residual is not None)
    args = [_seed_arr(seed), a.astype(jnp.bfloat16), w, scale, bias]
    if residual is not None:
        args.append(residual.astype(jnp.bfloat16))
    return call(*args)


def im2col(x, kh, kw, stride, pad):
    """NHWC -> (N*OH*OW, kh*kw*C) patches (cross-correlation tap order)."""
    # TODO(synk): 3x3/7x7 im2col still materializes kh*kw-times-larger patches
    # in HBM; lowering those convs as kh*kw tap-accumulating matmuls (K grid
    # axis over taps with element-offset index maps) would remove that traffic.
    if pad > 0:
        x = jnp.pad(x, ((0, 0), (pad, pad), (pad, pad), (0, 0)))
    n, h, w, c = x.shape
    oh = (h - kh) // stride + 1
    ow = (w - kw) // stride + 1
    if kh == 1 and kw == 1:
        patches = x[:, ::stride, ::stride, :]
    else:
        taps = []
        for i in range(kh):
            for j in range(kw):
                taps.append(x[:, i:i + stride * (oh - 1) + 1:stride,
                              j:j + stride * (ow - 1) + 1:stride, :])
        patches = jnp.concatenate(taps, axis=-1)
    return patches.reshape(n * oh * ow, kh * kw * c), oh, ow


def conv_bn(x, cp, *, stride, pad, relu, drop_p, seed, residual=None):
    """Conv2d(bias=False) + folded BatchNorm2d(eval) [+ residual] [+ ReLU] [+ dropout].

    Output keeps lane-padded channels (multiple of 128); the padded channels
    are exactly zero and the next layer's folded weight has zero K-rows there,
    so no slice copies are needed between stages.
    """
    kh, kw, oc = cp['kh'], cp['kw'], cp['oc']           # oc already lane-padded
    a, oh, ow = im2col(x, kh, kw, stride, pad)
    y = mm_bn_act(a, cp['w'], cp['scale'], cp['bias'], seed,
                  relu=relu, drop_p=drop_p, residual=residual)
    return y.reshape(x.shape[0], oh, ow, oc)


def maxpool_3x3_s2p1(x):
    """nn.MaxPool2d(kernel_size=3, stride=2, padding=1) on an NHWC bf16 tensor."""
    N, H, W, C = x.shape
    oh = (H - 1) // 2 + 1
    ow = (W - 1) // 2 + 1
    hp = _round_up(H + 2, 2)
    wp = _round_up(W + 2, 2)
    xp = jnp.pad(x, ((0, 0), (1, hp - H - 1), (1, wp - W - 1), (0, 0)),
                 constant_values=-jnp.inf)
    # Four (row, col) parity planes built once in plain JAX so the kernel only
    # needs unit-stride shifted reads and lane-dense (C=128) stores.
    x00 = xp[:, 0::2, 0::2, :]
    x01 = xp[:, 0::2, 1::2, :]
    x10 = xp[:, 1::2, 0::2, :]
    x11 = xp[:, 1::2, 1::2, :]
    call = _build_maxpool_call(N, hp // 2, wp // 2, C, oh, ow)
    return call(x00, x01, x10, x11)


def head(x, fc_w, fc_b, seed, *, drop_p):
    """sigmoid(fc1(F.dropout(adaptive_avg_pool(x).squeeze(), p=drop_p)))."""
    N, H, W, C = x.shape
    call = _build_head_call(N, H * W, C, float(drop_p))
    return call(_seed_arr(seed),
                x.reshape(N, H * W, C),
                fc_w.astype(jnp.float32),
                fc_b.reshape(1, 1).astype(jnp.float32))


def bottleneck(x, blk, *, drop_p, seed_base):
    # TODO(synk): exact dropout placement inside resnet50dropout is not
    # published with the module; assume MC-dropout (always-on F.dropout) after
    # the first two ReLUs of every bottleneck (common resnet50dropout variant).
    s = blk['stride']
    if 'down' in blk:
        identity = conv_bn(x, blk['down'], stride=s, pad=0,
                           relu=False, drop_p=0.0, seed=0)
    else:
        identity = x
    out = conv_bn(x, blk['conv1'], stride=1, pad=0,
                  relu=True, drop_p=drop_p, seed=seed_base + 0)
    out = conv_bn(out, blk['conv2'], stride=s, pad=1,
                  relu=True, drop_p=drop_p, seed=seed_base + 1)
    n, h, w, c = identity.shape
    res = identity.reshape(n * h * w, c)
    # residual add + final ReLU fused into conv3's matmul epilogue
    out = conv_bn(out, blk['conv3'], stride=1, pad=0,
                  relu=True, drop_p=0.0, seed=0, residual=res)
    return out


# ----------------------------------------------------------------------------
# Parameters: synthetic PyTorch-style weights + one-time folding/padding
# ----------------------------------------------------------------------------
def init_params(key):
    counter = [0]

    def nk():
        counter[0] += 1
        return jax.random.fold_in(key, counter[0])

    def conv(oc, ic, kh, kw):
        fan_in = ic * kh * kw
        std = (2.0 / fan_in) ** 0.5
        return jax.random.normal(nk(), (oc, ic, kh, kw), jnp.float32) * std

    def bn(c):
        return dict(gamma=jnp.ones((c,), jnp.float32),
                    beta=jnp.zeros((c,), jnp.float32),
                    mean=jnp.zeros((c,), jnp.float32),
                    var=jnp.ones((c,), jnp.float32))

    params = {'conv1': conv(64, 3, 7, 7), 'bn1': bn(64)}
    in_c = 64
    layers = []
    for planes, nblocks, stride in [(64, 3, 1), (128, 4, 2), (256, 6, 2), (512, 3, 2)]:
        blocks = []
        for b in range(nblocks):
            s = stride if b == 0 else 1
            blk = {'stride': s,
                   'conv1': conv(planes, in_c, 1, 1), 'bn1': bn(planes),
                   'conv2': conv(planes, planes, 3, 3), 'bn2': bn(planes),
                   'conv3': conv(planes * 4, planes, 1, 1), 'bn3': bn(planes * 4)}
            if s != 1 or in_c != planes * 4:
                blk['down_conv'] = conv(planes * 4, in_c, 1, 1)
                blk['down_bn'] = bn(planes * 4)
            blocks.append(blk)
            in_c = planes * 4
        layers.append(blocks)
    params['layers'] = layers
    params['fc_w'] = jax.random.normal(nk(), (2048, 1), jnp.float32) * (1.0 / 2048.0 ** 0.5)
    params['fc_b'] = jnp.zeros((1,), jnp.float32)
    return params


def fold_params(raw):
    """One-time: fold BN(eval) into per-channel scale/bias, transpose conv
    weights to (K, OC) matmul layout, lane-pad OC (and IC for non-stem convs,
    matching the padded activations), cast weights to bf16."""
    def fold(w, bn, pad_ic):
        oc, ic, kh, kw = w.shape
        scale = bn['gamma'] / jnp.sqrt(bn['var'] + BN_EPS)
        bias = bn['beta'] - bn['mean'] * scale
        icp = _round_up(ic, 128) if pad_ic else ic
        if icp != ic:
            w = jnp.pad(w, ((0, 0), (0, icp - ic), (0, 0), (0, 0)))
        wmat = jnp.transpose(w, (2, 3, 1, 0)).reshape(kh * kw * icp, oc)
        ocp = _round_up(oc, 128)
        if ocp != oc:
            wmat = jnp.pad(wmat, ((0, 0), (0, ocp - oc)))
            scale = jnp.pad(scale, (0, ocp - oc))
            bias = jnp.pad(bias, (0, ocp - oc))
        return dict(w=wmat.astype(jnp.bfloat16),
                    scale=scale.reshape(1, ocp).astype(jnp.float32),
                    bias=bias.reshape(1, ocp).astype(jnp.float32),
                    kh=kh, kw=kw, oc=ocp)

    out = {'conv1': fold(raw['conv1'], raw['bn1'], pad_ic=False)}
    layers = []
    for blocks in raw['layers']:
        fblocks = []
        for blk in blocks:
            fb = {'stride': blk['stride'],
                  'conv1': fold(blk['conv1'], blk['bn1'], pad_ic=True),
                  'conv2': fold(blk['conv2'], blk['bn2'], pad_ic=True),
                  'conv3': fold(blk['conv3'], blk['bn3'], pad_ic=True)}
            if 'down_conv' in blk:
                fb['down'] = fold(blk['down_conv'], blk['down_bn'], pad_ic=True)
            fblocks.append(fb)
        layers.append(fblocks)
    out['layers'] = layers
    out['fc_w'] = raw['fc_w'].astype(jnp.float32)
    out['fc_b'] = raw['fc_b'].astype(jnp.float32)
    return out


# ----------------------------------------------------------------------------
# Forward pass (matches ResnetDropoutFull.forward)
# ----------------------------------------------------------------------------
def forward(params, x_nchw, *, dropout=0.2, seed=0):
    x = jnp.transpose(x_nchw, (0, 2, 3, 1)).astype(jnp.bfloat16)  # NCHW -> NHWC

    # resnet stem: conv1 7x7/2 + BN + ReLU (128-padded channels), maxpool 3x3/2
    x = conv_bn(x, params['conv1'], stride=2, pad=3, relu=True, drop_p=0.0, seed=0)
    x = maxpool_3x3_s2p1(x)

    # layer1..layer4
    sidx = (int(seed) & 0xFFFF) * 65536 + 1
    for blocks in params['layers']:
        for blk in blocks:
            x = bottleneck(x, blk, drop_p=dropout, seed_base=sidx)
            sidx += 4

    # x = sigmoid(fc1(F.dropout(avgpool(x).squeeze(), p=dropout)))  -> (N, 1)
    return head(x, params['fc_w'], params['fc_b'], sidx, drop_p=dropout)


if __name__ == "__main__":
    key = jax.random.PRNGKey(0)
    pkey, xkey = jax.random.split(key)
    params = fold_params(init_params(pkey))
    x = jax.random.normal(xkey, (2, 3, 64, 64), jnp.float32)  # small NCHW input

    out = forward(params, x, dropout=0.2, seed=0)
    out = jax.block_until_ready(out)

    assert out.shape == (2, 1), out.shape
    assert bool(jnp.all((out >= 0.0) & (out <= 1.0)))
    print("KERNEL_OK")
</pallas_src>

<mosaic_0001>
module attributes {stable_mosaic.version = 11 : i64} {
  func.func @_mm_bn_act_kernel(%arg0: i32, %arg1: i32, %arg2: memref<1xi32, #tpu.memory_space<smem>>, %arg3: memref<512x147xbf16, #tpu.memory_space<vmem>>, %arg4: memref<147x128xbf16, #tpu.memory_space<vmem>>, %arg5: memref<1x128xf32, #tpu.memory_space<vmem>>, %arg6: memref<1x128xf32, #tpu.memory_space<vmem>>, %arg7: memref<512x128xbf16, #tpu.memory_space<vmem>>) attributes {dimension_semantics = [#tpu.dimension_semantics<parallel>, #tpu.dimension_semantics<parallel>], iteration_bounds = array<i64: 1, 4>, scalar_prefetch = 0 : i64, scratch_operands = 0 : i64, tpu.core_type = #tpu.core_type<tc>, window_params = [{transform_indices = @transform_0, window_bounds = array<i64: 1>}, {transform_indices = @transform_1, window_bounds = array<i64: 512, 147>}, {transform_indices = @transform_2, window_bounds = array<i64: 147, 128>}, {transform_indices = @transform_3, window_bounds = array<i64: 1, 128>}, {transform_indices = @transform_4, window_bounds = array<i64: 1, 128>}, {transform_indices = @transform_5, window_bounds = array<i64: 512, 128>}]} {
    %c0 = arith.constant 0 : index
    %c0_0 = arith.constant 0 : index
    %0 = vector.load %arg3[%c0, %c0_0] : memref<512x147xbf16, #tpu.memory_space<vmem>>, vector<512x147xbf16>
    %c0_1 = arith.constant 0 : index
    %c0_2 = arith.constant 0 : index
    %1 = vector.load %arg4[%c0_1, %c0_2] : memref<147x128xbf16, #tpu.memory_space<vmem>>, vector<147x128xbf16>
    %cst = arith.constant dense<0.000000e+00> : vector<512x128xf32>
    %2 = tpu.matmul %0, %1, %cst {dimension_numbers = #tpu.dot_dimension_numbers<[1], [0], [0], [1], [0, 0, 1, 1], [], []>} : vector<512x147xbf16>, vector<147x128xbf16>, vector<512x128xf32> -> vector<512x128xf32>
    %c0_3 = arith.constant 0 : index
    %c0_4 = arith.constant 0 : index
    %3 = vector.load %arg5[%c0_3, %c0_4] : memref<1x128xf32, #tpu.memory_space<vmem>>, vector<1x128xf32>
    %4 = vector.broadcast %3 : vector<1x128xf32> to vector<512x128xf32>
    %5 = arith.mulf %2, %4 : vector<512x128xf32>
    %c0_5 = arith.constant 0 : index
    %c0_6 = arith.constant 0 : index
    %6 = vector.load %arg6[%c0_5, %c0_6] : memref<1x128xf32, #tpu.memory_space<vmem>>, vector<1x128xf32>
    %7 = vector.broadcast %6 : vector<1x128xf32> to vector<512x128xf32>
    %8 = arith.addf %5, %7 : vector<512x128xf32>
    %cst_7 = arith.constant 0.000000e+00 : f32
    %9 = vector.broadcast %cst_7 : f32 to vector<512x128xf32>
    %10 = arith.maximumf %8, %9 : vector<512x128xf32>
    %11 = arith.truncf %10 : vector<512x128xf32> to vector<512x128xbf16>
    %c0_8 = arith.constant 0 : index
    %c0_9 = arith.constant 0 : index
    %12 = vector.load %arg7[%c0_8, %c0_9] : memref<512x128xbf16, #tpu.memory_space<vmem>>, vector<512x128xbf16>
    tpu.vector_store %arg7[%c0_8, %c0_9], %11 {strides = array<i32>} : memref<512x128xbf16, #tpu.memory_space<vmem>>, vector<512x128xbf16>,
    return
  }
  func.func @transform_0(%arg0: i32, %arg1: i32) -> i32 {
    %c0_i32 = arith.constant 0 : i32
    %c0_i32_0 = arith.constant 0 : i32
    return %c0_i32 : i32
  }
  func.func @transform_1(%arg0: i32, %arg1: i32) -> (i32, i32) {
    %c0_i32 = arith.constant 0 : i32
    %c0_i32_0 = arith.constant 0 : i32
    return %arg1, %c0_i32 : i32, i32
  }
  func.func @transform_2(%arg0: i32, %arg1: i32) -> (i32, i32) {
    %c0_i32 = arith.constant 0 : i32
    %c0_i32_0 = arith.constant 0 : i32
    return %c0_i32, %arg0 : i32, i32
  }
  func.func @transform_3(%arg0: i32, %arg1: i32) -> (i32, i32) {
    %c0_i32 = arith.constant 0 : i32
    %c0_i32_0 = arith.constant 0 : i32
    return %c0_i32, %arg0 : i32, i32
  }
  func.func @transform_4(%arg0: i32, %arg1: i32) -> (i32, i32) {
    %c0_i32 = arith.constant 0 : i32
    %c0_i32_0 = arith.constant 0 : i32
    return %c0_i32, %arg0 : i32, i32
  }
  func.func @transform_5(%arg0: i32, %arg1: i32) -> (i32, i32) {
    %c0_i32 = arith.constant 0 : i32
    return %arg1, %arg0 : i32, i32
  }
}

</mosaic_0001>

<llo_original>
// kernel: tpu_custom_call.1
$region0: #{tpu_custom_call.1}
  #allocation0 [shape = 'u32[]', space=smem, size = 0x4, offset = 0x4, fixed_abs, tag = 'smem constant byte address 0x4 - core index']
  #allocation1 [shape = 'u32[144,128]{1,0:T(1,128)}', space=vmem, size = 0x12000, scoped, tag = 'internal scratch']
  #allocation2 [shape = 's32[1]{0:T(128)S(6)}', space=smem, size = 0x200, scoped, tag = 'scoped memory for tpu_custom_call.1']
  %s0 = inlined_call_operand.<no memory space> [shape: s32[1], index: 0, kind: input, shape index: {}]
  %s1 = inlined_call_operand.vmem [shape: bf16[2048,147], index: 1, kind: input, shape index: {}]
  %s2 = inlined_call_operand.vmem [shape: bf16[147,128], index: 2, kind: input, shape index: {}]
  %s3 = inlined_call_operand.vmem [shape: f32[1,128], index: 3, kind: input, shape index: {}]
  %s4 = inlined_call_operand.vmem [shape: f32[1,128], index: 4, kind: input, shape index: {}]
  %s5 = inlined_call_operand.hbm [shape: bf16[2048,128], index: 5, kind: output, shape index: {}]
  %s6 = sld [smem:[#allocation0]]
  $region53: #{tpu_custom_call.1} parent=0
    _
  %s8 = ssub.s32 1, %s6
  %s9 = scalar_select 0, %s8, %s6
  %10 = sst [smem:[#allocation2]] %s0
  $region1: #{tpu_custom_call.1} parent=0
    #allocation3 [shape = 'u8[262144]{0}', space=vmem, size = 0x40000, scoped, tag = 'output window, operand 0']
    #allocation4 [shape = 's32[2]{0}', space=sflag, size = 0x8, scoped, tag = 'scoped memory for tpu_custom_call.1']
    %11 = vsyncpa [#allocation4], 0
    %s12 = scalar_lea.sflag [#allocation4], 1
    %13 = vsyncpa %s12, 0
    loop: start=0, step=1, limit=6
    $region2: #{tpu_custom_call.1} parent=1 // loop_pre_header
      _
    $region3: #{tpu_custom_call.1} parent=1 // loop_header
      %s15 = sphi 0, %s19
      %p16 = scmp.ge.s32.totalorder %s15, 6
      %s22 = sphi 0, %s34
      %s23 = sphi 0, %s30
      %s24 = sphi 0, %s22
      %s25 = sphi 0, %s23
      %s26 = sphi 0, %s24
      %s27 = sphi 0, %s25
      %s35 = sphi 0, %s35
      %s37 = sphi 0, %s35
      %s38 = sphi 0, %s37
      %s52 = sphi 0, %s38
      %s58 = sphi 0, %s60
      %s61 = sphi 0, %s58
      %s62 = sphi 0, %s61
      %s78 = sphi 0, %s62
      %s84 = sphi 0, %s86
      %s87 = sphi 0, %s84
      %s88 = sphi 0, %s87
      %s104 = sphi 0, %s88
      %s110 = sphi 0, %s112
      %s113 = sphi 0, %s110
      %s114 = sphi 0, %s113
      %s130 = sphi 0, %s114
      %s136 = sphi 0, %s138
      %s139 = sphi 0, %s136
      %s140 = sphi 0, %s139
      %s156 = sphi 0, %s140
      %s164 = sphi 0, %s166
      %s167 = sphi 0, %s164
      %s168 = sphi 0, %s167
      %s184 = sphi 0, %s168
    $region4: #{tpu_custom_call.1} parent=1 // loop_header_branch
      %18 = sbr.rel (%p16) target = $region8
    $region5: #{tpu_custom_call.1} parent=1 // loop_body
      %s20 = ssub.s32 %s15, 1
      %s21 = ssub.s32 %s15, 2
      %s28 = sadd.s32 1, %s23
      %p29 = scmp.ge.s32.totalorder %s28, 4
      %s30 = scalar_select %p29, 0, %s28
      %s31 = sadd.s32 1, %s22
      %s32 = scalar_select %p29, %s31, %s22
      %p33 = scmp.ge.s32.totalorder %s32, 1
      %s34 = scalar_select %p33, 0, %s32
      %s36 = sadd.s32 %s35, 1
      %p39 = scmp.eq.s32.totalorder %s15, 3
      %p40 = scmp.ne.s32.totalorder %s35, %s37
      %p41 = scmp.eq.s32.totalorder %s15, 0
      %p42 = por %p40, %p41
      %p43 = scmp.ne.s32.totalorder %s35, %s37
      %p44 = scmp.eq.s32.totalorder %s20, 3
      %p45 = por %p43, %p44
      %p46 = scmp.ne.s32.totalorder %s37, %s38
      %p47 = scmp.eq.s32.totalorder %s20, 0
      %p48 = por %p46, %p47
      %p49 = scmp.ne.s32.totalorder %s37, %s38
      %p50 = scmp.eq.s32.totalorder %s21, 3
      %p51 = por %p49, %p50
      %p53 = scmp.ne.s32.totalorder %s38, %s52
      %p54 = scmp.eq.s32.totalorder %s21, 0
      %p55 = por %p53, %p54
      %s56 = ssub.s32 %s23, %s30
      %p57 = scmp.eq.s32.totalorder %s56, 0
      %s59 = sadd.s32 %s58, 1
      %s60 = scalar_select %p57, %s58, %s59
      %p63 = pneg %p57
      %p64 = scmp.eq.s32.totalorder %s15, 3
      %p65 = por %p63, %p64
      %p66 = scmp.ne.s32.totalorder %s58, %s61
      %p67 = scmp.eq.s32.totalorder %s15, 0
      %p68 = por %p66, %p67
      %p69 = scmp.ne.s32.totalorder %s58, %s61
      %p70 = scmp.eq.s32.totalorder %s20, 3
      %p71 = por %p69, %p70
      %p72 = scmp.ne.s32.totalorder %s61, %s62
      %p73 = scmp.eq.s32.totalorder %s20, 0
      %p74 = por %p72, %p73
      %p75 = scmp.ne.s32.totalorder %s61, %s62
      %p76 = scmp.eq.s32.totalorder %s21, 3
      %p77 = por %p75, %p76
      %p79 = scmp.ne.s32.totalorder %s62, %s78
      %p80 = scmp.eq.s32.totalorder %s21, 0
      %p81 = por %p79, %p80
      %s82 = ssub.s32 %s22, %s34
      %p83 = scmp.eq.s32.totalorder %s82, 0
      %s85 = sadd.s32 %s84, 1
      %s86 = scalar_select %p83, %s84, %s85
      %p89 = pneg %p83
      %p90 = scmp.eq.s32.totalorder %s15, 3
      %p91 = por %p89, %p90
      %p92 = scmp.ne.s32.totalorder %s84, %s87
      %p93 = scmp.eq.s32.totalorder %s15, 0
      %p94 = por %p92, %p93
      %p95 = scmp.ne.s32.totalorder %s84, %s87
      %p96 = scmp.eq.s32.totalorder %s20, 3
      %p97 = por %p95, %p96
      %p98 = scmp.ne.s32.totalorder %s87, %s88
      %p99 = scmp.eq.s32.totalorder %s20, 0
      %p100 = por %p98, %p99
      %p101 = scmp.ne.s32.totalorder %s87, %s88
      %p102 = scmp.eq.s32.totalorder %s21, 3
      %p103 = por %p101, %p102
      %p105 = scmp.ne.s32.totalorder %s88, %s104
      %p106 = scmp.eq.s32.totalorder %s21, 0
      %p107 = por %p105, %p106
      %s108 = ssub.s32 %s22, %s34
      %p109 = scmp.eq.s32.totalorder %s108, 0
      %s111 = sadd.s32 %s110, 1
      %s112 = scalar_select %p109, %s110, %s111
      %p115 = pneg %p109
      %p116 = scmp.eq.s32.totalorder %s15, 3
      %p117 = por %p115, %p116
      %p118 = scmp.ne.s32.totalorder %s110, %s113
      %p119 = scmp.eq.s32.totalorder %s15, 0
      %p120 = por %p118, %p119
      %p121 = scmp.ne.s32.totalorder %s110, %s113
      %p122 = scmp.eq.s32.totalorder %s20, 3
      %p123 = por %p121, %p122
      %p124 = scmp.ne.s32.totalorder %s113, %s114
      %p125 = scmp.eq.s32.totalorder %s20, 0
      %p126 = por %p124, %p125
      %p127 = scmp.ne.s32.totalorder %s113, %s114
      %p128 = scmp.eq.s32.totalorder %s21, 3
      %p129 = por %p127, %p128
      %p131 = scmp.ne.s32.totalorder %s114, %s130
      %p132 = scmp.eq.s32.totalorder %s21, 0
      %p133 = por %p131, %p132
      %s134 = ssub.s32 %s22, %s34
      %p135 = scmp.eq.s32.totalorder %s134, 0
      %s137 = sadd.s32 %s136, 1
      %s138 = scalar_select %p135, %s136, %s137
      %p141 = pneg %p135
      %p142 = scmp.eq.s32.totalorder %s15, 3
      %p143 = por %p141, %p142
      %p144 = scmp.ne.s32.totalorder %s136, %s139
      %p145 = scmp.eq.s32.totalorder %s15, 0
      %p146 = por %p144, %p145
      %p147 = scmp.ne.s32.totalorder %s136, %s139
      %p148 = scmp.eq.s32.totalorder %s20, 3
      %p149 = por %p147, %p148
      %p150 = scmp.ne.s32.totalorder %s139, %s140
      %p151 = scmp.eq.s32.totalorder %s20, 0
      %p152 = por %p150, %p151
      %p153 = scmp.ne.s32.totalorder %s139, %s140
      %p154 = scmp.eq.s32.totalorder %s21, 3
      %p155 = por %p153, %p154
      %p157 = scmp.ne.s32.totalorder %s140, %s156
      %p158 = scmp.eq.s32.totalorder %s21, 0
      %p159 = por %p157, %p158
      %s160 = ssub.s32 %s23, %s30
      %s161 = ssub.s32 %s22, %s34
      %s162 = sor.u32 %s160, %s161
      %p163 = scmp.eq.s32.totalorder %s162, 0
      %s165 = sadd.s32 %s164, 1
      %s166 = scalar_select %p163, %s164, %s165
      %p169 = pneg %p163
      %p170 = scmp.eq.s32.totalorder %s15, 3
      %p171 = por %p169, %p170
      %p172 = scmp.ne.s32.totalorder %s164, %s167
      %p173 = scmp.eq.s32.totalorder %s15, 0
      %p174 = por %p172, %p173
      %p175 = scmp.ne.s32.totalorder %s164, %s167
      %p176 = scmp.eq.s32.totalorder %s20, 3
      %p177 = por %p175, %p176
      %p178 = scmp.ne.s32.totalorder %s167, %s168
      %p179 = scmp.eq.s32.totalorder %s20, 0
      %p180 = por %p178, %p179
      %p181 = scmp.ne.s32.totalorder %s167, %s168
      %p182 = scmp.eq.s32.totalorder %s21, 3
      %p183 = por %p181, %p182
      %p185 = scmp.ne.s32.totalorder %s168, %s184
      %p186 = scmp.eq.s32.totalorder %s21, 0
      %p187 = por %p185, %p186
      %p188 = scmp.le.s32.totalorder 1, %s15
      %p189 = scmp.lt.s32.totalorder %s15, 5
      %p190 = pnand %p188, %p189
      %p191 = pneg %p190
      // Predicated region
      $region9: #{tpu_custom_call.1} parent=5 // pred_check
        _
      $region10: #{tpu_custom_call.1} parent=5 // pred_check_branch
        %193 = sbr.rel (%p190) target = $region12
      $region11: #{tpu_custom_call.1} parent=5 // pred_region
        %s194 = ssub.s32 %s15, 1
        // Predicated region
        $region13: #{tpu_custom_call.1} parent=11 // pred_check
          %p195 = pneg %p48
        $region14: #{tpu_custom_call.1} parent=11 // pred_check_branch
          %197 = sbr.rel (%p195) target = $region16
        $region15: #{tpu_custom_call.1} parent=11 // pred_region
          _
        $region16: #{tpu_custom_call.1} parent=11 // pred_fallthru
          _
        // Predicated region
        $region17: #{tpu_custom_call.1} parent=11 // pred_check
          %p198 = pneg %p100
        $region18: #{tpu_custom_call.1} parent=11 // pred_check_branch
          %200 = sbr.rel (%p198) target = $region20
        $region19: #{tpu_custom_call.1} parent=11 // pred_region
          %p201 = scmp.lt.s32.totalorder %s24, 0
          %s202 = scalar_select %p201, %s24, 0
          %s203 = smul.addr %s202, 4
          %s204 = scalar_lea.vmem %s2, %s203
        $region20: #{tpu_custom_call.1} parent=11 // pred_fallthru
          _
        // Predicated region
        $region21: #{tpu_custom_call.1} parent=11 // pred_check
          %p205 = pneg %p126
        $region22: #{tpu_custom_call.1} parent=11 // pred_check_branch
          %207 = sbr.rel (%p205) target = $region24
        $region23: #{tpu_custom_call.1} parent=11 // pred_region
          %p208 = scmp.lt.s32.totalorder %s24, 0
          %s209 = scalar_select %p208, %s24, 0
          %s210 = scalar_lea.vmem %s3, %s209
        $region24: #{tpu_custom_call.1} parent=11 // pred_fallthru
          _
        // Predicated region
        $region25: #{tpu_custom_call.1} parent=11 // pred_check
          %p211 = pneg %p152
        $region26: #{tpu_custom_call.1} parent=11 // pred_check_branch
          %213 = sbr.rel (%p211) target = $region28
        $region27: #{tpu_custom_call.1} parent=11 // pred_region
          %p214 = scmp.lt.s32.totalorder %s24, 0
          %s215 = scalar_select %p214, %s24, 0
          %s216 = scalar_lea.vmem %s4, %s215
        $region28: #{tpu_custom_call.1} parent=11 // pred_fallthru
          _
      $region12: #{tpu_custom_call.1} parent=5 // pred_fallthru
        _
      %p217 = scmp.lt.s32.totalorder %s15, 4
      // Predicated region
      $region29: #{tpu_custom_call.1} parent=5 // pred_check
        %p218 = pneg %p217
      $region30: #{tpu_custom_call.1} parent=5 // pred_check_branch
        %220 = sbr.rel (%p218) target = $region32
      $region31: #{tpu_custom_call.1} parent=5 // pred_region
        // Predicated region
        $region33: #{tpu_custom_call.1} parent=31 // pred_check
          %p221 = pneg %p68
        $region34: #{tpu_custom_call.1} parent=31 // pred_check_branch
          %223 = sbr.rel (%p221) target = $region36
        $region35: #{tpu_custom_call.1} parent=31 // pred_region
          %s224 = smul.u32 64, %s23
          %p225 = scmp.lt.s32.totalorder %s224, 255
          %s226 = scalar_select %p225, %s224, 255
          %s227 = smul.addr %s226, 2
          %s228 = smul.addr %s227, 4
          %s229 = scalar_lea.vmem %s1, %s228
          %s230 = smul.u32 64, %s23
        $region36: #{tpu_custom_call.1} parent=31 // pred_fallthru
          _
      $region32: #{tpu_custom_call.1} parent=5 // pred_fallthru
        _
      %p231 = scmp.le.s32.totalorder 1, %s15
      %p232 = scmp.lt.s32.totalorder %s15, 5
      %p233 = pnand %p231, %p232
      %p234 = pneg %p233
      // Predicated region
      $region37: #{tpu_custom_call.1} parent=5 // pred_check
        _
      $region38: #{tpu_custom_call.1} parent=5 // pred_check_branch
        %236 = sbr.rel (%p233) target = $region40
      $region39: #{tpu_custom_call.1} parent=5 // pred_region
        %s237 = ssub.s32 %s15, 1
        %p238 = pneg %p48
        %p239 = pneg %p45
        %s240 = smul.u32 64, %s25
        %p241 = scmp.lt.s32.totalorder %s240, 255
        %s242 = scalar_select %p241, %s240, 255
        %s243 = smul.addr %s242, 2
        %s244 = smul.addr %s243, 4
        %s245 = scalar_lea.vmem %s1, %s244
        %p246 = pneg %p74
        %p247 = pneg %p71
        %p248 = scmp.lt.s32.totalorder %s24, 0
        %s249 = scalar_select %p248, %s24, 0
        %s250 = smul.addr %s249, 4
        %s251 = scalar_lea.vmem %s2, %s250
        %p252 = pneg %p100
        %p253 = pneg %p97
        %p254 = scmp.lt.s32.totalorder %s24, 0
        %s255 = scalar_select %p254, %s24, 0
        %s256 = scalar_lea.vmem %s3, %s255
        %p257 = pneg %p126
        %p258 = pneg %p123
        %p259 = scmp.lt.s32.totalorder %s24, 0
        %s260 = scalar_select %p259, %s24, 0
        %s261 = scalar_lea.vmem %s4, %s260
        %p262 = pneg %p152
        %p263 = pneg %p149
        %p264 = pneg %p180
        %p265 = pneg %p177
        %s266 = sand.u32 %s167, 1
        %s267 = scalar_lea.sflag [#allocation4], %s266
        %s268 = sand.u32 %s167, 1
        %s269 = smul.addr %s268, 256
        %s270 = scalar_lea.vmem [#allocation3], %s269
        %s271 = smul.u32 64, %s25
        %p272 = scmp.lt.s32.totalorder %s271, 255
        %s273 = scalar_select %p272, %s271, 255
        %s274 = smul.addr %s273, 2
        %s275 = smul.addr %s274, 4
        %s276 = scalar_lea.vmem %s1, %s275
        %s277 = smul.u32 64, %s25
        %p278 = scmp.lt.s32.totalorder %s24, 0
        %s279 = scalar_select %p278, %s24, 0
        %s280 = smul.addr %s279, 4
        %s281 = scalar_lea.vmem %s2, %s280
        %p282 = scmp.lt.s32.totalorder %s24, 0
        %s283 = scalar_select %p282, %s24, 0
        %s284 = scalar_lea.vmem %s3, %s283
        %p285 = scmp.lt.s32.totalorder %s24, 0
        %s286 = scalar_select %p285, %s24, 0
        %s287 = scalar_lea.vmem %s4, %s286
        %s288 = smul.u32 64, %s25
        %v290 = vld [vmem:[%s276] sm:$0xff]
        %v291 = vld [vmem:[%s276 + $0x8] sm:$0xff]
        %v292 = vld [vmem:[%s276 + $0x10] sm:$0xff]
        %v293 = vld [vmem:[%s276 + $0x18] sm:$0xff]
        %v294 = vld [vmem:[%s276 + $0x20] sm:$0xff]
        %v295 = vld [vmem:[%s276 + $0x28] sm:$0xff]
        %v296 = vld [vmem:[%s276 + $0x30] sm:$0xff]
        %v297 = vld [vmem:[%s276 + $0x38] sm:$0xff]
        %v298 = vld [vmem:[%s276 + $0x40] sm:$0xff]
        %v299 = vld [vmem:[%s276 + $0x48] sm:$0xff]
        %v300 = vld [vmem:[%s276 + $0x50] sm:$0xff]
        %v301 = vld [vmem:[%s276 + $0x58] sm:$0xff]
        %v302 = vld [vmem:[%s276 + $0x60] sm:$0xff]
        %v303 = vld [vmem:[%s276 + $0x68] sm:$0xff]
        %v304 = vld [vmem:[%s276 + $0x70] sm:$0xff]
        %v305 = vld [vmem:[%s276 + $0x78] sm:$0xff]
        %v306 = vld [vmem:[%s276 + $0x80] sm:$0xff]
        %v307 = vld [vmem:[%s276 + $0x88] sm:$0xff]
        %v308 = vld [vmem:[%s276 + $0x90] sm:$0xff]
        %v309 = vld [vmem:[%s276 + $0x98] sm:$0xff]
        %v310 = vld [vmem:[%s276 + $0xa0] sm:$0xff]
        %v311 = vld [vmem:[%s276 + $0xa8] sm:$0xff]
        %v312 = vld [vmem:[%s276 + $0xb0] sm:$0xff]
        %v313 = vld [vmem:[%s276 + $0xb8] sm:$0xff]
        %v314 = vld [vmem:[%s276 + $0xc0] sm:$0xff]
        %v315 = vld [vmem:[%s276 + $0xc8] sm:$0xff]
        %v316 = vld [vmem:[%s276 + $0xd0] sm:$0xff]
        %v317 = vld [vmem:[%s276 + $0xd8] sm:$0xff]
        %v318 = vld [vmem:[%s276 + $0xe0] sm:$0xff]
        %v319 = vld [vmem:[%s276 + $0xe8] sm:$0xff]
        %v320 = vld [vmem:[%s276 + $0xf0] sm:$0xff]
        %v321 = vld [vmem:[%s276 + $0xf8] sm:$0xff]
        %v322 = vld [vmem:[%s276 + $0x100] sm:$0xff]
        %v323 = vld [vmem:[%s276 + $0x108] sm:$0xff]
        %v324 = vld [vmem:[%s276 + $0x110] sm:$0xff]
        %v325 = vld [vmem:[%s276 + $0x118] sm:$0xff]
        %v326 = vld [vmem:[%s276 + $0x120] sm:$0xff]
        %v327 = vld [vmem:[%s276 + $0x128] sm:$0xff]
        %v328 = vld [vmem:[%s276 + $0x130] sm:$0xff]
        %v329 = vld [vmem:[%s276 + $0x138] sm:$0xff]
        %v330 = vld [vmem:[%s276 + $0x140] sm:$0xff]
        %v331 = vld [vmem:[%s276 + $0x148] sm:$0xff]
        %v332 = vld [vmem:[%s276 + $0x150] sm:$0xff]
        %v333 = vld [vmem:[%s276 + $0x158] sm:$0xff]
        %v334 = vld [vmem:[%s276 + $0x160] sm:$0xff]
        %v335 = vld [vmem:[%s276 + $0x168] sm:$0xff]
        %v336 = vld [vmem:[%s276 + $0x170] sm:$0xff]
        %v337 = vld [vmem:[%s276 + $0x178] sm:$0xff]
        %v338 = vld [vmem:[%s276 + $0x180] sm:$0xff]
        %v339 = vld [vmem:[%s276 + $0x188] sm:$0xff]
        %v340 = vld [vmem:[%s276 + $0x190] sm:$0xff]
        %v341 = vld [vmem:[%s276 + $0x198] sm:$0xff]
        %v342 = vld [vmem:[%s276 + $0x1a0] sm:$0xff]
        %v343 = vld [vmem:[%s276 + $0x1a8] sm:$0xff]
        %v344 = vld [vmem:[%s276 + $0x1b0] sm:$0xff]
        %v345 = vld [vmem:[%s276 + $0x1b8] sm:$0xff]
        %v346 = vld [vmem:[%s276 + $0x1c0] sm:$0xff]
        %v347 = vld [vmem:[%s276 + $0x1c8] sm:$0xff]
        %v348 = vld [vmem:[%s276 + $0x1d0] sm:$0xff]
        %v349 = vld [vmem:[%s276 + $0x1d8] sm:$0xff]
        %v350 = vld [vmem:[%s276 + $0x1e0] sm:$0xff]
        %v351 = vld [vmem:[%s276 + $0x1e8] sm:$0xff]
        %v352 = vld [vmem:[%s276 + $0x1f0] sm:$0xff]
        %v353 = vld [vmem:[%s276 + $0x1f8] sm:$0xff]
        %v354 = vld [vmem:[%s281] sm:$0xf]
        %v355 = vld [vmem:[%s281 + $0x4] sm:$0xf]
        %v356 = vld [vmem:[%s281 + $0x8] sm:$0xf]
        %v357 = vld [vmem:[%s281 + $0xc] sm:$0xf]
        %v358 = vld [vmem:[%s281 + $0x10] sm:$0xf]
        %v359 = vld [vmem:[%s281 + $0x14] sm:$0xf]
        %v360 = vld [vmem:[%s281 + $0x18] sm:$0xf]
        %v361 = vld [vmem:[%s281 + $0x1c] sm:$0xf]
        %v362 = vld [vmem:[%s281 + $0x20] sm:$0xf]
        %v363 = vld [vmem:[%s281 + $0x24] sm:$0xf]
        %v364 = vld [vmem:[%s281 + $0x28] sm:$0xf]
        %v365 = vld [vmem:[%s281 + $0x2c] sm:$0xf]
        %v366 = vld [vmem:[%s281 + $0x30] sm:$0xf]
        %v367 = vld [vmem:[%s281 + $0x34] sm:$0xf]
        %v368 = vld [vmem:[%s281 + $0x38] sm:$0xf]
        %v369 = vld [vmem:[%s281 + $0x3c] sm:$0xf]
        %v370 = vld [vmem:[%s281 + $0x40] sm:$0xf]
        %v371 = vld [vmem:[%s281 + $0x44] sm:$0xf]
        %v372 = vld [vmem:[%s281 + $0x48] sm:$0x3]
        %v437 = vunpack.c.l.b16 %v290
        %v438 = vunpack.c.h.b16 %v290
        %v439 = vunpack.c.l.b16 %v291
        %v440 = vunpack.c.h.b16 %v291
        %v441 = vunpack.c.l.b16 %v292
        %v442 = vunpack.c.h.b16 %v292
        %v443 = vunpack.c.l.b16 %v293
        %v444 = vunpack.c.h.b16 %v293
        %v445 = vunpack.c.l.b16 %v294
        %v446 = vunpack.c.h.b16 %v294
        %v447 = vunpack.c.l.b16 %v295
        %v448 = vunpack.c.h.b16 %v295
        %v449 = vunpack.c.l.b16 %v296
        %v450 = vunpack.c.h.b16 %v296
        %v451 = vunpack.c.l.b16 %v297
        %v452 = vunpack.c.h.b16 %v297
        %v453 = vunpack.c.l.b16 %v298
        %v454 = vunpack.c.h.b16 %v298
        %v455 = vunpack.c.l.b16 %v299
        %v456 = vunpack.c.h.b16 %v299
        %v457 = vunpack.c.l.b16 %v300
        %v458 = vunpack.c.h.b16 %v300
        %v459 = vunpack.c.l.b16 %v301
        %v460 = vunpack.c.h.b16 %v301
        %v461 = vunpack.c.l.b16 %v302
        %v462 = vunpack.c.h.b16 %v302
        %v463 = vunpack.c.l.b16 %v303
        %v464 = vunpack.c.h.b16 %v303
        %v465 = vunpack.c.l.b16 %v304
        %v466 = vunpack.c.h.b16 %v304
        %v467 = vunpack.c.l.b16 %v305
        %v468 = vunpack.c.h.b16 %v305
        %v469 = vunpack.c.l.b16 %v306
        %v470 = vunpack.c.h.b16 %v306
        %v471 = vunpack.c.l.b16 %v307
        %v472 = vunpack.c.h.b16 %v307
        %v473 = vunpack.c.l.b16 %v308
        %v474 = vunpack.c.h.b16 %v308
        %v475 = vunpack.c.l.b16 %v309
        %v476 = vunpack.c.h.b16 %v309
        %v477 = vunpack.c.l.b16 %v310
        %v478 = vunpack.c.h.b16 %v310
        %v479 = vunpack.c.l.b16 %v311
        %v480 = vunpack.c.h.b16 %v311
        %v481 = vunpack.c.l.b16 %v312
        %v482 = vunpack.c.h.b16 %v312
        %v483 = vunpack.c.l.b16 %v313
        %v484 = vunpack.c.h.b16 %v313
        %v485 = vunpack.c.l.b16 %v314
        %v486 = vunpack.c.h.b16 %v314
        %v487 = vunpack.c.l.b16 %v315
        %v488 = vunpack.c.h.b16 %v315
        %v489 = vunpack.c.l.b16 %v316
        %v490 = vunpack.c.h.b16 %v316
        %v491 = vunpack.c.l.b16 %v317
        %v492 = vunpack.c.h.b16 %v317
        %v493 = vunpack.c.l.b16 %v318
        %v494 = vunpack.c.h.b16 %v318
        %v495 = vunpack.c.l.b16 %v319
        %v496 = vunpack.c.h.b16 %v319
        %v497 = vunpack.c.l.b16 %v320
        %v498 = vunpack.c.h.b16 %v320
        %v499 = vunpack.c.l.b16 %v321
        %v500 = vunpack.c.h.b16 %v321
        %v501 = vunpack.c.l.b16 %v322
        %v502 = vunpack.c.h.b16 %v322
        %v503 = vunpack.c.l.b16 %v323
        %v504 = vunpack.c.h.b16 %v323
        %v505 = vunpack.c.l.b16 %v324
        %v506 = vunpack.c.h.b16 %v324
        %v507 = vunpack.c.l.b16 %v325
        %v508 = vunpack.c.h.b16 %v325
        %v509 = vunpack.c.l.b16 %v326
        %v510 = vunpack.c.h.b16 %v326
        %v511 = vunpack.c.l.b16 %v327
        %v512 = vunpack.c.h.b16 %v327
        %v513 = vunpack.c.l.b16 %v328
        %v514 = vunpack.c.h.b16 %v328
        %v515 = vunpack.c.l.b16 %v329
        %v516 = vunpack.c.h.b16 %v329
        %v517 = vunpack.c.l.b16 %v330
        %v518 = vunpack.c.h.b16 %v330
        %v519 = vunpack.c.l.b16 %v331
        %v520 = vunpack.c.h.b16 %v331
        %v521 = vunpack.c.l.b16 %v332
        %v522 = vunpack.c.h.b16 %v332
        %v523 = vunpack.c.l.b16 %v333
        %v524 = vunpack.c.h.b16 %v333
        %v525 = vunpack.c.l.b16 %v334
        %v526 = vunpack.c.h.b16 %v334
        %v527 = vunpack.c.l.b16 %v335
        %v528 = vunpack.c.h.b16 %v335
        %v529 = vunpack.c.l.b16 %v336
        %v530 = vunpack.c.h.b16 %v336
        %v531 = vunpack.c.l.b16 %v337
        %v532 = vunpack.c.h.b16 %v337
        %v533 = vunpack.c.l.b16 %v338
        %v534 = vunpack.c.h.b16 %v338
        %v535 = vunpack.c.l.b16 %v339
        %v536 = vunpack.c.h.b16 %v339
        %v537 = vunpack.c.l.b16 %v340
        %v538 = vunpack.c.h.b16 %v340
        %v539 = vunpack.c.l.b16 %v341
        %v540 = vunpack.c.h.b16 %v341
        %v541 = vunpack.c.l.b16 %v342
        %v542 = vunpack.c.h.b16 %v342
        %v543 = vunpack.c.l.b16 %v343
        %v544 = vunpack.c.h.b16 %v343
        %v545 = vunpack.c.l.b16 %v344
        %v546 = vunpack.c.h.b16 %v344
        %v547 = vunpack.c.l.b16 %v345
        %v548 = vunpack.c.h.b16 %v345
        %v549 = vunpack.c.l.b16 %v346
        %v550 = vunpack.c.h.b16 %v346
        %v551 = vunpack.c.l.b16 %v347
        %v552 = vunpack.c.h.b16 %v347
        %v553 = vunpack.c.l.b16 %v348
        %v554 = vunpack.c.h.b16 %v348
        %v555 = vunpack.c.l.b16 %v349
        %v556 = vunpack.c.h.b16 %v349
        %v557 = vunpack.c.l.b16 %v350
        %v558 = vunpack.c.h.b16 %v350
        %v559 = vunpack.c.l.b16 %v351
        %v560 = vunpack.c.h.b16 %v351
        %v561 = vunpack.c.l.b16 %v352
        %v562 = vunpack.c.h.b16 %v352
        %v563 = vunpack.c.l.b16 %v353
        %v564 = vunpack.c.h.b16 %v353
        %v565 = vpack.c.b16 %v439, %v437
        %v566 = vpack.c.b16 %v440, %v438
        %v567 = vpack.c.b16 %v443, %v441
        %v568 = vpack.c.b16 %v444, %v442
        %v569 = vpack.c.b16 %v447, %v445
        %v570 = vpack.c.b16 %v448, %v446
        %v571 = vpack.c.b16 %v451, %v449
        %v572 = vpack.c.b16 %v452, %v450
        %v573 = vpack.c.b16 %v455, %v453
        %v574 = vpack.c.b16 %v456, %v454
        %v575 = vpack.c.b16 %v459, %v457
        %v576 = vpack.c.b16 %v460, %v458
        %v577 = vpack.c.b16 %v463, %v461
        %v578 = vpack.c.b16 %v464, %v462
        %v579 = vpack.c.b16 %v467, %v465
        %v580 = vpack.c.b16 %v468, %v466
        %v581 = vpack.c.b16 %v471, %v469
        %v582 = vpack.c.b16 %v472, %v470
        %v583 = vpack.c.b16 %v475, %v473
        %v584 = vpack.c.b16 %v476, %v474
        %v585 = vpack.c.b16 %v479, %v477
        %v586 = vpack.c.b16 %v480, %v478
        %v587 = vpack.c.b16 %v483, %v481
        %v588 = vpack.c.b16 %v484, %v482
        %v589 = vpack.c.b16 %v487, %v485
        %v590 = vpack.c.b16 %v488, %v486
        %v591 = vpack.c.b16 %v491, %v489
        %v592 = vpack.c.b16 %v492, %v490
        %v593 = vpack.c.b16 %v495, %v493
        %v594 = vpack.c.b16 %v496, %v494
        %v595 = vpack.c.b16 %v499, %v497
        %v596 = vpack.c.b16 %v500, %v498
        %v597 = vpack.c.b16 %v503, %v501
        %v598 = vpack.c.b16 %v504, %v502
        %v599 = vpack.c.b16 %v507, %v505
        %v600 = vpack.c.b16 %v508, %v506
        %v601 = vpack.c.b16 %v511, %v509
        %v602 = vpack.c.b16 %v512, %v510
        %v603 = vpack.c.b16 %v515, %v513
        %v604 = vpack.c.b16 %v516, %v514
        %v605 = vpack.c.b16 %v519, %v517
        %v606 = vpack.c.b16 %v520, %v518
        %v607 = vpack.c.b16 %v523, %v521
        %v608 = vpack.c.b16 %v524, %v522
        %v609 = vpack.c.b16 %v527, %v525
        %v610 = vpack.c.b16 %v528, %v526
        %v611 = vpack.c.b16 %v531, %v529
        %v612 = vpack.c.b16 %v532, %v530
        %v613 = vpack.c.b16 %v535, %v533
        %v614 = vpack.c.b16 %v536, %v534
        %v615 = vpack.c.b16 %v539, %v537
        %v616 = vpack.c.b16 %v540, %v538
        %v617 = vpack.c.b16 %v543, %v541
        %v618 = vpack.c.b16 %v544, %v542
        %v619 = vpack.c.b16 %v547, %v545
        %v620 = vpack.c.b16 %v548, %v546
        %v621 = vpack.c.b16 %v551, %v549
        %v622 = vpack.c.b16 %v552, %v550
        %v623 = vpack.c.b16 %v555, %v553
        %v624 = vpack.c.b16 %v556, %v554
        %v625 = vpack.c.b16 %v559, %v557
        %v626 = vpack.c.b16 %v560, %v558
        %v627 = vpack.c.b16 %v563, %v561
        %v628 = vpack.c.b16 %v564, %v562
        %v680 = vunpack.c.l.b16 %v354
        %v681 = vunpack.c.l.b16 %v355
        %v682 = vunpack.c.l.b16 %v356
        %v683 = vunpack.c.l.b16 %v357
        %v684 = vunpack.c.l.b16 %v358
        %v685 = vunpack.c.l.b16 %v359
        %v686 = vunpack.c.l.b16 %v360
        %v687 = vunpack.c.l.b16 %v361
        %v688 = vunpack.c.l.b16 %v362
        %v689 = vunpack.c.l.b16 %v363
        %v690 = vunpack.c.l.b16 %v364
        %v691 = vunpack.c.l.b16 %v365
        %v692 = vunpack.c.l.b16 %v366
        %v693 = vunpack.c.l.b16 %v367
        %v694 = vunpack.c.l.b16 %v368
        %v695 = vunpack.c.l.b16 %v369
        %v696 = vunpack.c.l.b16 %v370
        %v697 = vunpack.c.l.b16 %v371
        %v698 = vunpack.c.l.b16 %v372
        %v699 = vpack.c.b16 %v681, %v680
        %v700 = vpack.c.b16 %v683, %v682
        %v701 = vpack.c.b16 %v685, %v684
        %v702 = vpack.c.b16 %v687, %v686
        %v703 = vpack.c.b16 %v689, %v688
        %v704 = vpack.c.b16 %v691, %v690
        %v705 = vpack.c.b16 %v693, %v692
        %v706 = vpack.c.b16 %v695, %v694
        %v707 = vpack.c.b16 %v697, %v696
        %v708 = vpack.c.b16 %v698, %v698
        %vm718 = vcmask 154624
        %v720 = vsel %vm718, %v566, 0
        %v723 = vsel %vm718, %v568, 0
        %v726 = vsel %vm718, %v570, 0
        %v729 = vsel %vm718, %v572, 0
        %v732 = vsel %vm718, %v574, 0
        %v735 = vsel %vm718, %v576, 0
        %v738 = vsel %vm718, %v578, 0
        %v741 = vsel %vm718, %v580, 0
        %v744 = vsel %vm718, %v582, 0
        %v747 = vsel %vm718, %v584, 0
        %v750 = vsel %vm718, %v586, 0
        %v753 = vsel %vm718, %v588, 0
        %v756 = vsel %vm718, %v590, 0
        %v759 = vsel %vm718, %v592, 0
        %v762 = vsel %vm718, %v594, 0
        %v765 = vsel %vm718, %v596, 0
        %v768 = vsel %vm718, %v598, 0
        %v771 = vsel %vm718, %v600, 0
        %v774 = vsel %vm718, %v602, 0
        %v777 = vsel %vm718, %v604, 0
        %v780 = vsel %vm718, %v606, 0
        %v783 = vsel %vm718, %v608, 0
        %v786 = vsel %vm718, %v610, 0
        %v789 = vsel %vm718, %v612, 0
        %v792 = vsel %vm718, %v614, 0
        %v795 = vsel %vm718, %v616, 0
        %v798 = vsel %vm718, %v618, 0
        %v801 = vsel %vm718, %v620, 0
        %v804 = vsel %vm718, %v622, 0
        %v807 = vsel %vm718, %v624, 0
        %v810 = vsel %vm718, %v626, 0
        %v813 = vsel %vm718, %v628, 0
        %vm815 = vcmask 1040384
        %vm816 = vcmask 1041408
        %v817 = vsel %vm815, 4294967295, 65535
        %v818 = vsel %vm816, %v817, 0
        %v820 = vand.u32 %v708, %v818
        %822 = vmatprep.subr.bf16.mxu0 0
        %823 = vmatpush1.bf16.msra.mxu0 %v706
        %824 = vmatprep.subr.bf16.mxu0 0
        %825 = vmatpush1.bf16.msra.mxu0 %v705
        %826 = vmatprep.subr.bf16.mxu0 0
        %827 = vmatpush1.bf16.msra.mxu0 %v704
        %828 = vmatprep.subr.bf16.mxu0 0
        %829 = vmatpush1.bf16.msra.mxu0 %v703
        %830 = vmatprep.subr.bf16.mxu0 0
        %831 = vmatpush1.bf16.msra.mxu0 %v702
        %832 = vmatprep.subr.bf16.mxu0 0
        %833 = vmatpush1.bf16.msra.mxu0 %v701
        %834 = vmatprep.subr.bf16.mxu0 0
        %835 = vmatpush1.bf16.msra.mxu0 %v700
        %836 = vmatprep.subr.bf16.mxu0 0
        %837 = vmatpush1.bf16.msra.mxu0 %v699
        %838 = vmatprep.subr.bf16.mxu0 0
        %839 = vmatpush2.bf16.msra.mxu0 0
        %840 = vmatprep.subr.bf16.mxu0 0
        %841 = vmatpush2.bf16.msra.mxu0 0
        %842 = vmatprep.subr.bf16.mxu0 0
        %843 = vmatpush2.bf16.msra.mxu0 0
        %844 = vmatprep.subr.bf16.mxu0 0
        %845 = vmatpush2.bf16.msra.mxu0 0
        %846 = vmatprep.subr.bf16.mxu0 0
        %847 = vmatpush2.bf16.msra.mxu0 0
        %848 = vmatprep.subr.bf16.mxu0 0
        %849 = vmatpush2.bf16.msra.mxu0 0
        %850 = vmatprep.subr.bf16.mxu0 0
        %851 = vmatpush2.bf16.msra.mxu0 %v820
        %852 = vmatprep.subr.bf16.mxu0 0
        %853 = vmatpush2.bf16.msra.mxu0 %v707
        %854 = vmatprep.mubr.bf16.mxu0 %v720
        %855 = vmatmul.mubr.bf16.gmra.mxu0 %v565
        %v856 = vpop.f32.mrf.mxu0
        %v857 = vadd.f32 0.0, %v856
        %v858 = vpop.f32.mrf.mxu0
        %v859 = vpop.f32.mrf.mxu0
        %v860 = vadd.f32 0.0, %v859
        %v861 = vpop.f32.mrf.mxu0
        %862 = vmatprep.mubr.bf16.mxu0 %v723
        %863 = vmatmul.mubr.bf16.gmra.mxu0 %v567
        %v864 = vpop.f32.mrf.mxu0
        %v865 = vadd.f32 0.0, %v864
        %v866 = vpop.f32.mrf.mxu0
        %v867 = vpop.f32.mrf.mxu0
        %v868 = vadd.f32 0.0, %v867
        %v869 = vpop.f32.mrf.mxu0
        %870 = vmatprep.mubr.bf16.mxu0 %v726
        %871 = vmatmul.mubr.bf16.gmra.mxu0 %v569
        %v872 = vpop.f32.mrf.mxu0
        %v873 = vadd.f32 0.0, %v872
        %v874 = vpop.f32.mrf.mxu0
        %v875 = vpop.f32.mrf.mxu0
        %v876 = vadd.f32 0.0, %v875
        %v877 = vpop.f32.mrf.mxu0
        %878 = vmatprep.mubr.bf16.mxu0 %v729
        %879 = vmatmul.mubr.bf16.gmra.mxu0 %v571
        %v880 = vpop.f32.mrf.mxu0
        %v881 = vadd.f32 0.0, %v880
        %v882 = vpop.f32.mrf.mxu0
        %v883 = vpop.f32.mrf.mxu0
        %v884 = vadd.f32 0.0, %v883
        %v885 = vpop.f32.mrf.mxu0
        %886 = vmatprep.mubr.bf16.mxu0 %v732
        %887 = vmatmul.mubr.bf16.gmra.mxu0 %v573
        %v888 = vpop.f32.mrf.mxu0
        %v889 = vadd.f32 0.0, %v888
        %v890 = vpop.f32.mrf.mxu0
        %v891 = vpop.f32.mrf.mxu0
        %v892 = vadd.f32 0.0, %v891
        %v893 = vpop.f32.mrf.mxu0
        %894 = vmatprep.mubr.bf16.mxu0 %v735
        %895 = vmatmul.mubr.bf16.gmra.mxu0 %v575
        %v896 = vpop.f32.mrf.mxu0
        %v897 = vadd.f32 0.0, %v896
        %v898 = vpop.f32.mrf.mxu0
        %v899 = vpop.f32.mrf.mxu0
        %v900 = vadd.f32 0.0, %v899
        %v901 = vpop.f32.mrf.mxu0
        %902 = vmatprep.mubr.bf16.mxu0 %v738
        %903 = vmatmul.mubr.bf16.gmra.mxu0 %v577
        %v904 = vpop.f32.mrf.mxu0
        %v905 = vadd.f32 0.0, %v904
        %v906 = vpop.f32.mrf.mxu0
        %v907 = vpop.f32.mrf.mxu0
        %v908 = vadd.f32 0.0, %v907
        %v909 = vpop.f32.mrf.mxu0
        %910 = vmatprep.mubr.bf16.mxu0 %v741
        %911 = vmatmul.mubr.bf16.gmra.mxu0 %v579
        %v912 = vpop.f32.mrf.mxu0
        %v913 = vadd.f32 0.0, %v912
        %v914 = vpop.f32.mrf.mxu0
        %v915 = vpop.f32.mrf.mxu0
        %v916 = vadd.f32 0.0, %v915
        %v917 = vpop.f32.mrf.mxu0
        %918 = vmatprep.mubr.bf16.mxu0 %v744
        %919 = vmatmul.mubr.bf16.gmra.mxu0 %v581
        %v920 = vpop.f32.mrf.mxu0
        %v921 = vadd.f32 0.0, %v920
        %v922 = vpop.f32.mrf.mxu0
        %v923 = vpop.f32.mrf.mxu0
        %v924 = vadd.f32 0.0, %v923
        %v925 = vpop.f32.mrf.mxu0
        %926 = vmatprep.mubr.bf16.mxu0 %v747
        %927 = vmatmul.mubr.bf16.gmra.mxu0 %v583
        %v928 = vpop.f32.mrf.mxu0
        %v929 = vadd.f32 0.0, %v928
        %v930 = vpop.f32.mrf.mxu0
        %v931 = vpop.f32.mrf.mxu0
        %v932 = vadd.f32 0.0, %v931
        %v933 = vpop.f32.mrf.mxu0
        %934 = vmatprep.mubr.bf16.mxu0 %v750
        %935 = vmatmul.mubr.bf16.gmra.mxu0 %v585
        %v936 = vpop.f32.mrf.mxu0
        %v937 = vadd.f32 0.0, %v936
        %v938 = vpop.f32.mrf.mxu0
        %v939 = vpop.f32.mrf.mxu0
        %v940 = vadd.f32 0.0, %v939
        %v941 = vpop.f32.mrf.mxu0
        %942 = vmatprep.mubr.bf16.mxu0 %v753
        %943 = vmatmul.mubr.bf16.gmra.mxu0 %v587
        %v944 = vpop.f32.mrf.mxu0
        %v945 = vadd.f32 0.0, %v944
        %v946 = vpop.f32.mrf.mxu0
        %v947 = vpop.f32.mrf.mxu0
        %v948 = vadd.f32 0.0, %v947
        %v949 = vpop.f32.mrf.mxu0
        %950 = vmatprep.mubr.bf16.mxu0 %v756
        %951 = vmatmul.mubr.bf16.gmra.mxu0 %v589
        %v952 = vpop.f32.mrf.mxu0
        %v953 = vadd.f32 0.0, %v952
        %v954 = vpop.f32.mrf.mxu0
        %v955 = vpop.f32.mrf.mxu0
        %v956 = vadd.f32 0.0, %v955
        %v957 = vpop.f32.mrf.mxu0
        %958 = vmatprep.mubr.bf16.mxu0 %v759
        %959 = vmatmul.mubr.bf16.gmra.mxu0 %v591
        %v960 = vpop.f32.mrf.mxu0
        %v961 = vadd.f32 0.0, %v960
        %v962 = vpop.f32.mrf.mxu0
        %v963 = vpop.f32.mrf.mxu0
        %v964 = vadd.f32 0.0, %v963
        %v965 = vpop.f32.mrf.mxu0
        %966 = vmatprep.mubr.bf16.mxu0 %v762
        %967 = vmatmul.mubr.bf16.gmra.mxu0 %v593
        %v968 = vpop.f32.mrf.mxu0
        %v969 = vadd.f32 0.0, %v968
        %v970 = vpop.f32.mrf.mxu0
        %v971 = vpop.f32.mrf.mxu0
        %v972 = vadd.f32 0.0, %v971
        %v973 = vpop.f32.mrf.mxu0
        %974 = vmatprep.mubr.bf16.mxu0 %v765
        %975 = vmatmul.mubr.bf16.gmra.mxu0 %v595
        %v976 = vpop.f32.mrf.mxu0
        %v977 = vadd.f32 0.0, %v976
        %v978 = vpop.f32.mrf.mxu0
        %v979 = vpop.f32.mrf.mxu0
        %v980 = vadd.f32 0.0, %v979
        %v981 = vpop.f32.mrf.mxu0
        %982 = vmatprep.mubr.bf16.mxu0 %v768
        %983 = vmatmul.mubr.bf16.gmra.mxu0 %v597
        %v984 = vpop.f32.mrf.mxu0
        %v985 = vadd.f32 0.0, %v984
        %v986 = vpop.f32.mrf.mxu0
        %v987 = vpop.f32.mrf.mxu0
        %v988 = vadd.f32 0.0, %v987
        %v989 = vpop.f32.mrf.mxu0
        %990 = vmatprep.mubr.bf16.mxu0 %v771
        %991 = vmatmul.mubr.bf16.gmra.mxu0 %v599
        %v992 = vpop.f32.mrf.mxu0
        %v993 = vadd.f32 0.0, %v992
        %v994 = vpop.f32.mrf.mxu0
        %v995 = vpop.f32.mrf.mxu0
        %v996 = vadd.f32 0.0, %v995
        %v997 = vpop.f32.mrf.mxu0
        %998 = vmatprep.mubr.bf16.mxu0 %v774
        %999 = vmatmul.mubr.bf16.gmra.mxu0 %v601
        %v1000 = vpop.f32.mrf.mxu0
        %v1001 = vadd.f32 0.0, %v1000
        %v1002 = vpop.f32.mrf.mxu0
        %v1003 = vpop.f32.mrf.mxu0
        %v1004 = vadd.f32 0.0, %v1003
        %v1005 = vpop.f32.mrf.mxu0
        %1006 = vmatprep.mubr.bf16.mxu0 %v777
        %1007 = vmatmul.mubr.bf16.gmra.mxu0 %v603
        %v1008 = vpop.f32.mrf.mxu0
        %v1009 = vadd.f32 0.0, %v1008
        %v1010 = vpop.f32.mrf.mxu0
        %v1011 = vpop.f32.mrf.mxu0
        %v1012 = vadd.f32 0.0, %v1011
        %v1013 = vpop.f32.mrf.mxu0
        %1014 = vmatprep.mubr.bf16.mxu0 %v780
        %1015 = vmatmul.mubr.bf16.gmra.mxu0 %v605
        %v1016 = vpop.f32.mrf.mxu0
        %v1017 = vadd.f32 0.0, %v1016
        %v1018 = vpop.f32.mrf.mxu0
        %v1019 = vpop.f32.mrf.mxu0
        %v1020 = vadd.f32 0.0, %v1019
        %v1021 = vpop.f32.mrf.mxu0
        %1022 = vmatprep.mubr.bf16.mxu0 %v783
        %1023 = vmatmul.mubr.bf16.gmra.mxu0 %v607
        %v1024 = vpop.f32.mrf.mxu0
        %v1025 = vadd.f32 0.0, %v1024
        %v1026 = vpop.f32.mrf.mxu0
        %v1027 = vpop.f32.mrf.mxu0
        %v1028 = vadd.f32 0.0, %v1027
        %v1029 = vpop.f32.mrf.mxu0
        %1030 = vmatprep.mubr.bf16.mxu0 %v786
        %1031 = vmatmul.mubr.bf16.gmra.mxu0 %v609
        %v1032 = vpop.f32.mrf.mxu0
        %v1033 = vadd.f32 0.0, %v1032
        %v1034 = vpop.f32.mrf.mxu0
        %v1035 = vpop.f32.mrf.mxu0
        %v1036 = vadd.f32 0.0, %v1035
        %v1037 = vpop.f32.mrf.mxu0
        %1038 = vmatprep.mubr.bf16.mxu0 %v789
        %1039 = vmatmul.mubr.bf16.gmra.mxu0 %v611
        %v1040 = vpop.f32.mrf.mxu0
        %v1041 = vadd.f32 0.0, %v1040
        %v1042 = vpop.f32.mrf.mxu0
        %v1043 = vpop.f32.mrf.mxu0
        %v1044 = vadd.f32 0.0, %v1043
        %v1045 = vpop.f32.mrf.mxu0
        %1046 = vmatprep.mubr.bf16.mxu0 %v792
        %1047 = vmatmul.mubr.bf16.gmra.mxu0 %v613
        %v1048 = vpop.f32.mrf.mxu0
        %v1049 = vadd.f32 0.0, %v1048
        %v1050 = vpop.f32.mrf.mxu0
        %v1051 = vpop.f32.mrf.mxu0
        %v1052 = vadd.f32 0.0, %v1051
        %v1053 = vpop.f32.mrf.mxu0
        %1054 = vmatprep.mubr.bf16.mxu0 %v795
        %1055 = vmatmul.mubr.bf16.gmra.mxu0 %v615
        %v1056 = vpop.f32.mrf.mxu0
        %v1057 = vadd.f32 0.0, %v1056
        %v1058 = vpop.f32.mrf.mxu0
        %v1059 = vpop.f32.mrf.mxu0
        %v1060 = vadd.f32 0.0, %v1059
        %v1061 = vpop.f32.mrf.mxu0
        %1062 = vmatprep.mubr.bf16.mxu0 %v798
        %1063 = vmatmul.mubr.bf16.gmra.mxu0 %v617
        %v1064 = vpop.f32.mrf.mxu0
        %v1065 = vadd.f32 0.0, %v1064
        %v1066 = vpop.f32.mrf.mxu0
        %v1067 = vpop.f32.mrf.mxu0
        %v1068 = vadd.f32 0.0, %v1067
        %v1069 = vpop.f32.mrf.mxu0
        %1070 = vmatprep.mubr.bf16.mxu0 %v801
        %1071 = vmatmul.mubr.bf16.gmra.mxu0 %v619
        %v1072 = vpop.f32.mrf.mxu0
        %v1073 = vadd.f32 0.0, %v1072
        %v1074 = vpop.f32.mrf.mxu0
        %v1075 = vpop.f32.mrf.mxu0
        %v1076 = vadd.f32 0.0, %v1075
        %v1077 = vpop.f32.mrf.mxu0
        %1078 = vmatprep.mubr.bf16.mxu0 %v804
        %1079 = vmatmul.mubr.bf16.gmra.mxu0 %v621
        %v1080 = vpop.f32.mrf.mxu0
        %v1081 = vadd.f32 0.0, %v1080
        %v1082 = vpop.f32.mrf.mxu0
        %v1083 = vpop.f32.mrf.mxu0
        %v1084 = vadd.f32 0.0, %v1083
        %v1085 = vpop.f32.mrf.mxu0
        %1086 = vmatprep.mubr.bf16.mxu0 %v807
        %1087 = vmatmul.mubr.bf16.gmra.mxu0 %v623
        %v1088 = vpop.f32.mrf.mxu0
        %v1089 = vadd.f32 0.0, %v1088
        %v1090 = vpop.f32.mrf.mxu0
        %v1091 = vpop.f32.mrf.mxu0
        %v1092 = vadd.f32 0.0, %v1091
        %v1093 = vpop.f32.mrf.mxu0
        %1094 = vmatprep.mubr.bf16.mxu0 %v810
        %1095 = vmatmul.mubr.bf16.gmra.mxu0 %v625
        %v1096 = vpop.f32.mrf.mxu0
        %v1097 = vadd.f32 0.0, %v1096
        %v1098 = vpop.f32.mrf.mxu0
        %v1099 = vpop.f32.mrf.mxu0
        %v1100 = vadd.f32 0.0, %v1099
        %v1101 = vpop.f32.mrf.mxu0
        %1102 = vmatprep.mubr.bf16.mxu0 %v813
        %1103 = vmatmul.mubr.bf16.gmra.mxu0 %v627
        %v1104 = vpop.f32.mrf.mxu0
        %v1105 = vadd.f32 0.0, %v1104
        %v1106 = vpop.f32.mrf.mxu0
        %v1107 = vpop.f32.mrf.mxu0
        %v1108 = vadd.f32 0.0, %v1107
        %v1109 = vpop.f32.mrf.mxu0
        %1110 = vdwg.mxu0
        %v1111 = vld [vmem:[%s284] sm:$0x1]
        %v1113 = vlaneseq
        %v1114 = vshrl.u32 %v1113, 7
        %v1115 = vsub.s32 0, %v1114
        %v1116 = vrot.slane %v1111, %v1115
        %v1118 = vmul.f32 %v857, %v1116
        %v1119 = vmul.f32 %v860, %v1116
        %v1120 = vmul.f32 %v865, %v1116
        %v1121 = vmul.f32 %v868, %v1116
        %v1122 = vmul.f32 %v873, %v1116
        %v1123 = vmul.f32 %v876, %v1116
        %v1124 = vmul.f32 %v881, %v1116
        %v1125 = vmul.f32 %v884, %v1116
        %v1126 = vmul.f32 %v889, %v1116
        %v1127 = vmul.f32 %v892, %v1116
        %v1128 = vmul.f32 %v897, %v1116
        %v1129 = vmul.f32 %v900, %v1116
        %v1130 = vmul.f32 %v905, %v1116
        %v1131 = vmul.f32 %v908, %v1116
        %v1132 = vmul.f32 %v913, %v1116
        %v1133 = vmul.f32 %v916, %v1116
        %v1134 = vmul.f32 %v921, %v1116
        %v1135 = vmul.f32 %v924, %v1116
        %v1136 = vmul.f32 %v929, %v1116
        %v1137 = vmul.f32 %v932, %v1116
        %v1138 = vmul.f32 %v937, %v1116
        %v1139 = vmul.f32 %v940, %v1116
        %v1140 = vmul.f32 %v945, %v1116
        %v1141 = vmul.f32 %v948, %v1116
        %v1142 = vmul.f32 %v953, %v1116
        %v1143 = vmul.f32 %v956, %v1116
        %v1144 = vmul.f32 %v961, %v1116
        %v1145 = vmul.f32 %v964, %v1116
        %v1146 = vmul.f32 %v969, %v1116
        %v1147 = vmul.f32 %v972, %v1116
        %v1148 = vmul.f32 %v977, %v1116
        %v1149 = vmul.f32 %v980, %v1116
        %v1150 = vmul.f32 %v985, %v1116
        %v1151 = vmul.f32 %v988, %v1116
        %v1152 = vmul.f32 %v993, %v1116
        %v1153 = vmul.f32 %v996, %v1116
        %v1154 = vmul.f32 %v1001, %v1116
        %v1155 = vmul.f32 %v1004, %v1116
        %v1156 = vmul.f32 %v1009, %v1116
        %v1157 = vmul.f32 %v1012, %v1116
        %v1158 = vmul.f32 %v1017, %v1116
        %v1159 = vmul.f32 %v1020, %v1116
        %v1160 = vmul.f32 %v1025, %v1116
        %v1161 = vmul.f32 %v1028, %v1116
        %v1162 = vmul.f32 %v1033, %v1116
        %v1163 = vmul.f32 %v1036, %v1116
        %v1164 = vmul.f32 %v1041, %v1116
        %v1165 = vmul.f32 %v1044, %v1116
        %v1166 = vmul.f32 %v1049, %v1116
        %v1167 = vmul.f32 %v1052, %v1116
        %v1168 = vmul.f32 %v1057, %v1116
        %v1169 = vmul.f32 %v1060, %v1116
        %v1170 = vmul.f32 %v1065, %v1116
        %v1171 = vmul.f32 %v1068, %v1116
        %v1172 = vmul.f32 %v1073, %v1116
        %v1173 = vmul.f32 %v1076, %v1116
        %v1174 = vmul.f32 %v1081, %v1116
        %v1175 = vmul.f32 %v1084, %v1116
        %v1176 = vmul.f32 %v1089, %v1116
        %v1177 = vmul.f32 %v1092, %v1116
        %v1178 = vmul.f32 %v1097, %v1116
        %v1179 = vmul.f32 %v1100, %v1116
        %v1180 = vmul.f32 %v1105, %v1116
        %v1181 = vmul.f32 %v1108, %v1116
        %v1182 = vld [vmem:[%s287] sm:$0x1]
        %v1184 = vlaneseq
        %v1185 = vshrl.u32 %v1184, 7
        %v1186 = vsub.s32 0, %v1185
        %v1187 = vrot.slane %v1182, %v1186
        %v1189 = vadd.f32 %v1118, %v1187
        %v1190 = vadd.f32 %v1119, %v1187
        %v1191 = vadd.f32 %v1120, %v1187
        %v1192 = vadd.f32 %v1121, %v1187
        %v1193 = vadd.f32 %v1122, %v1187
        %v1194 = vadd.f32 %v1123, %v1187
        %v1195 = vadd.f32 %v1124, %v1187
        %v1196 = vadd.f32 %v1125, %v1187
        %v1197 = vadd.f32 %v1126, %v1187
        %v1198 = vadd.f32 %v1127, %v1187
        %v1199 = vadd.f32 %v1128, %v1187
        %v1200 = vadd.f32 %v1129, %v1187
        %v1201 = vadd.f32 %v1130, %v1187
        %v1202 = vadd.f32 %v1131, %v1187
        %v1203 = vadd.f32 %v1132, %v1187
        %v1204 = vadd.f32 %v1133, %v1187
        %v1205 = vadd.f32 %v1134, %v1187
        %v1206 = vadd.f32 %v1135, %v1187
        %v1207 = vadd.f32 %v1136, %v1187
        %v1208 = vadd.f32 %v1137, %v1187
        %v1209 = vadd.f32 %v1138, %v1187
        %v1210 = vadd.f32 %v1139, %v1187
        %v1211 = vadd.f32 %v1140, %v1187
        %v1212 = vadd.f32 %v1141, %v1187
        %v1213 = vadd.f32 %v1142, %v1187
        %v1214 = vadd.f32 %v1143, %v1187
        %v1215 = vadd.f32 %v1144, %v1187
        %v1216 = vadd.f32 %v1145, %v1187
        %v1217 = vadd.f32 %v1146, %v1187
        %v1218 = vadd.f32 %v1147, %v1187
        %v1219 = vadd.f32 %v1148, %v1187
        %v1220 = vadd.f32 %v1149, %v1187
        %v1221 = vadd.f32 %v1150, %v1187
        %v1222 = vadd.f32 %v1151, %v1187
        %v1223 = vadd.f32 %v1152, %v1187
        %v1224 = vadd.f32 %v1153, %v1187
        %v1225 = vadd.f32 %v1154, %v1187
        %v1226 = vadd.f32 %v1155, %v1187
        %v1227 = vadd.f32 %v1156, %v1187
        %v1228 = vadd.f32 %v1157, %v1187
        %v1229 = vadd.f32 %v1158, %v1187
        %v1230 = vadd.f32 %v1159, %v1187
        %v1231 = vadd.f32 %v1160, %v1187
        %v1232 = vadd.f32 %v1161, %v1187
        %v1233 = vadd.f32 %v1162, %v1187
        %v1234 = vadd.f32 %v1163, %v1187
        %v1235 = vadd.f32 %v1164, %v1187
        %v1236 = vadd.f32 %v1165, %v1187
        %v1237 = vadd.f32 %v1166, %v1187
        %v1238 = vadd.f32 %v1167, %v1187
        %v1239 = vadd.f32 %v1168, %v1187
        %v1240 = vadd.f32 %v1169, %v1187
        %v1241 = vadd.f32 %v1170, %v1187
        %v1242 = vadd.f32 %v1171, %v1187
        %v1243 = vadd.f32 %v1172, %v1187
        %v1244 = vadd.f32 %v1173, %v1187
        %v1245 = vadd.f32 %v1174, %v1187
        %v1246 = vadd.f32 %v1175, %v1187
        %v1247 = vadd.f32 %v1176, %v1187
        %v1248 = vadd.f32 %v1177, %v1187
        %v1249 = vadd.f32 %v1178, %v1187
        %v1250 = vadd.f32 %v1179, %v1187
        %v1251 = vadd.f32 %v1180, %v1187
        %v1252 = vadd.f32 %v1181, %v1187
        %v1253 = vmax.f32 %v1189, 0.0
        %v1254 = vmax.f32 %v1190, 0.0
        %v1255 = vmax.f32 %v1191, 0.0
        %v1256 = vmax.f32 %v1192, 0.0
        %v1257 = vmax.f32 %v1193, 0.0
        %v1258 = vmax.f32 %v1194, 0.0
        %v1259 = vmax.f32 %v1195, 0.0
        %v1260 = vmax.f32 %v1196, 0.0
        %v1261 = vmax.f32 %v1197, 0.0
        %v1262 = vmax.f32 %v1198, 0.0
        %v1263 = vmax.f32 %v1199, 0.0
        %v1264 = vmax.f32 %v1200, 0.0
        %v1265 = vmax.f32 %v1201, 0.0
        %v1266 = vmax.f32 %v1202, 0.0
        %v1267 = vmax.f32 %v1203, 0.0
        %v1268 = vmax.f32 %v1204, 0.0
        %v1269 = vmax.f32 %v1205, 0.0
        %v1270 = vmax.f32 %v1206, 0.0
        %v1271 = vmax.f32 %v1207, 0.0
        %v1272 = vmax.f32 %v1208, 0.0
        %v1273 = vmax.f32 %v1209, 0.0
        %v1274 = vmax.f32 %v1210, 0.0
        %v1275 = vmax.f32 %v1211, 0.0
        %v1276 = vmax.f32 %v1212, 0.0
        %v1277 = vmax.f32 %v1213, 0.0
        %v1278 = vmax.f32 %v1214, 0.0
        %v1279 = vmax.f32 %v1215, 0.0
        %v1280 = vmax.f32 %v1216, 0.0
        %v1281 = vmax.f32 %v1217, 0.0
        %v1282 = vmax.f32 %v1218, 0.0
        %v1283 = vmax.f32 %v1219, 0.0
        %v1284 = vmax.f32 %v1220, 0.0
        %v1285 = vmax.f32 %v1221, 0.0
        %v1286 = vmax.f32 %v1222, 0.0
        %v1287 = vmax.f32 %v1223, 0.0
        %v1288 = vmax.f32 %v1224, 0.0
        %v1289 = vmax.f32 %v1225, 0.0
        %v1290 = vmax.f32 %v1226, 0.0
        %v1291 = vmax.f32 %v1227, 0.0
        %v1292 = vmax.f32 %v1228, 0.0
        %v1293 = vmax.f32 %v1229, 0.0
        %v1294 = vmax.f32 %v1230, 0.0
        %v1295 = vmax.f32 %v1231, 0.0
        %v1296 = vmax.f32 %v1232, 0.0
        %v1297 = vmax.f32 %v1233, 0.0
        %v1298 = vmax.f32 %v1234, 0.0
        %v1299 = vmax.f32 %v1235, 0.0
        %v1300 = vmax.f32 %v1236, 0.0
        %v1301 = vmax.f32 %v1237, 0.0
        %v1302 = vmax.f32 %v1238, 0.0
        %v1303 = vmax.f32 %v1239, 0.0
        %v1304 = vmax.f32 %v1240, 0.0
        %v1305 = vmax.f32 %v1241, 0.0
        %v1306 = vmax.f32 %v1242, 0.0
        %v1307 = vmax.f32 %v1243, 0.0
        %v1308 = vmax.f32 %v1244, 0.0
        %v1309 = vmax.f32 %v1245, 0.0
        %v1310 = vmax.f32 %v1246, 0.0
        %v1311 = vmax.f32 %v1247, 0.0
        %v1312 = vmax.f32 %v1248, 0.0
        %v1313 = vmax.f32 %v1249, 0.0
        %v1314 = vmax.f32 %v1250, 0.0
        %v1315 = vmax.f32 %v1251, 0.0
        %v1316 = vmax.f32 %v1252, 0.0
        %v1317 = vpack.c.bf16 %v1254, %v1253
        %v1318 = vpack.c.bf16 %v1256, %v1255
        %v1319 = vpack.c.bf16 %v1258, %v1257
        %v1320 = vpack.c.bf16 %v1260, %v1259
        %v1321 = vpack.c.bf16 %v1262, %v1261
        %v1322 = vpack.c.bf16 %v1264, %v1263
        %v1323 = vpack.c.bf16 %v1266, %v1265
        %v1324 = vpack.c.bf16 %v1268, %v1267
        %v1325 = vpack.c.bf16 %v1270, %v1269
        %v1326 = vpack.c.bf16 %v1272, %v1271
        %v1327 = vpack.c.bf16 %v1274, %v1273
        %v1328 = vpack.c.bf16 %v1276, %v1275
        %v1329 = vpack.c.bf16 %v1278, %v1277
        %v1330 = vpack.c.bf16 %v1280, %v1279
        %v1331 = vpack.c.bf16 %v1282, %v1281
        %v1332 = vpack.c.bf16 %v1284, %v1283
        %v1333 = vpack.c.bf16 %v1286, %v1285
        %v1334 = vpack.c.bf16 %v1288, %v1287
        %v1335 = vpack.c.bf16 %v1290, %v1289
        %v1336 = vpack.c.bf16 %v1292, %v1291
        %v1337 = vpack.c.bf16 %v1294, %v1293
        %v1338 = vpack.c.bf16 %v1296, %v1295
        %v1339 = vpack.c.bf16 %v1298, %v1297
        %v1340 = vpack.c.bf16 %v1300, %v1299
        %v1341 = vpack.c.bf16 %v1302, %v1301
        %v1342 = vpack.c.bf16 %v1304, %v1303
        %v1343 = vpack.c.bf16 %v1306, %v1305
        %v1344 = vpack.c.bf16 %v1308, %v1307
        %v1345 = vpack.c.bf16 %v1310, %v1309
        %v1346 = vpack.c.bf16 %v1312, %v1311
        %v1347 = vpack.c.bf16 %v1314, %v1313
        %v1348 = vpack.c.bf16 %v1316, %v1315
        %v1381 = vunpack.c.l.b16 %v1317
        %v1382 = vunpack.c.h.b16 %v1317
        %v1383 = vunpack.c.l.b16 %v1318
        %v1384 = vunpack.c.h.b16 %v1318
        %v1385 = vunpack.c.l.b16 %v1319
        %v1386 = vunpack.c.h.b16 %v1319
        %v1387 = vunpack.c.l.b16 %v1320
        %v1388 = vunpack.c.h.b16 %v1320
        %v1389 = vunpack.c.l.b16 %v1321
        %v1390 = vunpack.c.h.b16 %v1321
        %v1391 = vunpack.c.l.b16 %v1322
        %v1392 = vunpack.c.h.b16 %v1322
        %v1393 = vunpack.c.l.b16 %v1323
        %v1394 = vunpack.c.h.b16 %v1323
        %v1395 = vunpack.c.l.b16 %v1324
        %v1396 = vunpack.c.h.b16 %v1324
        %v1397 = vunpack.c.l.b16 %v1325
        %v1398 = vunpack.c.h.b16 %v1325
        %v1399 = vunpack.c.l.b16 %v1326
        %v1400 = vunpack.c.h.b16 %v1326
        %v1401 = vunpack.c.l.b16 %v1327
        %v1402 = vunpack.c.h.b16 %v1327
        %v1403 = vunpack.c.l.b16 %v1328
        %v1404 = vunpack.c.h.b16 %v1328
        %v1405 = vunpack.c.l.b16 %v1329
        %v1406 = vunpack.c.h.b16 %v1329
        %v1407 = vunpack.c.l.b16 %v1330
        %v1408 = vunpack.c.h.b16 %v1330
        %v1409 = vunpack.c.l.b16 %v1331
        %v1410 = vunpack.c.h.b16 %v1331
        %v1411 = vunpack.c.l.b16 %v1332
        %v1412 = vunpack.c.h.b16 %v1332
        %v1413 = vunpack.c.l.b16 %v1333
        %v1414 = vunpack.c.h.b16 %v1333
        %v1415 = vunpack.c.l.b16 %v1334
        %v1416 = vunpack.c.h.b16 %v1334
        %v1417 = vunpack.c.l.b16 %v1335
        %v1418 = vunpack.c.h.b16 %v1335
        %v1419 = vunpack.c.l.b16 %v1336
        %v1420 = vunpack.c.h.b16 %v1336
        %v1421 = vunpack.c.l.b16 %v1337
        %v1422 = vunpack.c.h.b16 %v1337
        %v1423 = vunpack.c.l.b16 %v1338
        %v1424 = vunpack.c.h.b16 %v1338
        %v1425 = vunpack.c.l.b16 %v1339
        %v1426 = vunpack.c.h.b16 %v1339
        %v1427 = vunpack.c.l.b16 %v1340
        %v1428 = vunpack.c.h.b16 %v1340
        %v1429 = vunpack.c.l.b16 %v1341
        %v1430 = vunpack.c.h.b16 %v1341
        %v1431 = vunpack.c.l.b16 %v1342
        %v1432 = vunpack.c.h.b16 %v1342
        %v1433 = vunpack.c.l.b16 %v1343
        %v1434 = vunpack.c.h.b16 %v1343
        %v1435 = vunpack.c.l.b16 %v1344
        %v1436 = vunpack.c.h.b16 %v1344
        %v1437 = vunpack.c.l.b16 %v1345
        %v1438 = vunpack.c.h.b16 %v1345
        %v1439 = vunpack.c.l.b16 %v1346
        %v1440 = vunpack.c.h.b16 %v1346
        %v1441 = vunpack.c.l.b16 %v1347
        %v1442 = vunpack.c.h.b16 %v1347
        %v1443 = vunpack.c.l.b16 %v1348
        %v1444 = vunpack.c.h.b16 %v1348
        %v1445 = vpack.c.b16 %v1381, %v1381
        %v1446 = vpack.c.b16 %v1382, %v1382
        %v1447 = vpack.c.b16 %v1383, %v1383
        %v1448 = vpack.c.b16 %v1384, %v1384
        %v1449 = vpack.c.b16 %v1385, %v1385
        %v1450 = vpack.c.b16 %v1386, %v1386
        %v1451 = vpack.c.b16 %v1387, %v1387
        %v1452 = vpack.c.b16 %v1388, %v1388
        %v1453 = vpack.c.b16 %v1389, %v1389
        %v1454 = vpack.c.b16 %v1390, %v1390
        %v1455 = vpack.c.b16 %v1391, %v1391
        %v1456 = vpack.c.b16 %v1392, %v1392
        %v1457 = vpack.c.b16 %v1393, %v1393
        %v1458 = vpack.c.b16 %v1394, %v1394
        %v1459 = vpack.c.b16 %v1395, %v1395
        %v1460 = vpack.c.b16 %v1396, %v1396
        %v1461 = vpack.c.b16 %v1397, %v1397
        %v1462 = vpack.c.b16 %v1398, %v1398
        %v1463 = vpack.c.b16 %v1399, %v1399
        %v1464 = vpack.c.b16 %v1400, %v1400
        %v1465 = vpack.c.b16 %v1401, %v1401
        %v1466 = vpack.c.b16 %v1402, %v1402
        %v1467 = vpack.c.b16 %v1403, %v1403
        %v1468 = vpack.c.b16 %v1404, %v1404
        %v1469 = vpack.c.b16 %v1405, %v1405
        %v1470 = vpack.c.b16 %v1406, %v1406
        %v1471 = vpack.c.b16 %v1407, %v1407
        %v1472 = vpack.c.b16 %v1408, %v1408
        %v1473 = vpack.c.b16 %v1409, %v1409
        %v1474 = vpack.c.b16 %v1410, %v1410
        %v1475 = vpack.c.b16 %v1411, %v1411
        %v1476 = vpack.c.b16 %v1412, %v1412
        %v1477 = vpack.c.b16 %v1413, %v1413
        %v1478 = vpack.c.b16 %v1414, %v1414
        %v1479 = vpack.c.b16 %v1415, %v1415
        %v1480 = vpack.c.b16 %v1416, %v1416
        %v1481 = vpack.c.b16 %v1417, %v1417
        %v1482 = vpack.c.b16 %v1418, %v1418
        %v1483 = vpack.c.b16 %v1419, %v1419
        %v1484 = vpack.c.b16 %v1420, %v1420
        %v1485 = vpack.c.b16 %v1421, %v1421
        %v1486 = vpack.c.b16 %v1422, %v1422
        %v1487 = vpack.c.b16 %v1423, %v1423
        %v1488 = vpack.c.b16 %v1424, %v1424
        %v1489 = vpack.c.b16 %v1425, %v1425
        %v1490 = vpack.c.b16 %v1426, %v1426
        %v1491 = vpack.c.b16 %v1427, %v1427
        %v1492 = vpack.c.b16 %v1428, %v1428
        %v1493 = vpack.c.b16 %v1429, %v1429
        %v1494 = vpack.c.b16 %v1430, %v1430
        %v1495 = vpack.c.b16 %v1431, %v1431
        %v1496 = vpack.c.b16 %v1432, %v1432
        %v1497 = vpack.c.b16 %v1433, %v1433
        %v1498 = vpack.c.b16 %v1434, %v1434
        %v1499 = vpack.c.b16 %v1435, %v1435
        %v1500 = vpack.c.b16 %v1436, %v1436
        %v1501 = vpack.c.b16 %v1437, %v1437
        %v1502 = vpack.c.b16 %v1438, %v1438
        %v1503 = vpack.c.b16 %v1439, %v1439
        %v1504 = vpack.c.b16 %v1440, %v1440
        %v1505 = vpack.c.b16 %v1441, %v1441
        %v1506 = vpack.c.b16 %v1442, %v1442
        %v1507 = vpack.c.b16 %v1443, %v1443
        %v1508 = vpack.c.b16 %v1444, %v1444
        %1573 = vst [vmem:[%s270] sm:$0xf] %v1445
        %1574 = vst [vmem:[%s270 + $0x4] sm:$0xf] %v1446
        %1575 = vst [vmem:[%s270 + $0x8] sm:$0xf] %v1447
        %1576 = vst [vmem:[%s270 + $0xc] sm:$0xf] %v1448
        %1577 = vst [vmem:[%s270 + $0x10] sm:$0xf] %v1449
        %1578 = vst [vmem:[%s270 + $0x14] sm:$0xf] %v1450
        %1579 = vst [vmem:[%s270 + $0x18] sm:$0xf] %v1451
        %1580 = vst [vmem:[%s270 + $0x1c] sm:$0xf] %v1452
        %1581 = vst [vmem:[%s270 + $0x20] sm:$0xf] %v1453
        %1582 = vst [vmem:[%s270 + $0x24] sm:$0xf] %v1454
        %1583 = vst [vmem:[%s270 + $0x28] sm:$0xf] %v1455
        %1584 = vst [vmem:[%s270 + $0x2c] sm:$0xf] %v1456
        %1585 = vst [vmem:[%s270 + $0x30] sm:$0xf] %v1457
        %1586 = vst [vmem:[%s270 + $0x34] sm:$0xf] %v1458
        %1587 = vst [vmem:[%s270 + $0x38] sm:$0xf] %v1459
        %1588 = vst [vmem:[%s270 + $0x3c] sm:$0xf] %v1460
        %1589 = vst [vmem:[%s270 + $0x40] sm:$0xf] %v1461
        %1590 = vst [vmem:[%s270 + $0x44] sm:$0xf] %v1462
        %1591 = vst [vmem:[%s270 + $0x48] sm:$0xf] %v1463
        %1592 = vst [vmem:[%s270 + $0x4c] sm:$0xf] %v1464
        %1593 = vst [vmem:[%s270 + $0x50] sm:$0xf] %v1465
        %1594 = vst [vmem:[%s270 + $0x54] sm:$0xf] %v1466
        %1595 = vst [vmem:[%s270 + $0x58] sm:$0xf] %v1467
        %1596 = vst [vmem:[%s270 + $0x5c] sm:$0xf] %v1468
        %1597 = vst [vmem:[%s270 + $0x60] sm:$0xf] %v1469
        %1598 = vst [vmem:[%s270 + $0x64] sm:$0xf] %v1470
        %1599 = vst [vmem:[%s270 + $0x68] sm:$0xf] %v1471
        %1600 = vst [vmem:[%s270 + $0x6c] sm:$0xf] %v1472
        %1601 = vst [vmem:[%s270 + $0x70] sm:$0xf] %v1473
        %1602 = vst [vmem:[%s270 + $0x74] sm:$0xf] %v1474
        %1603 = vst [vmem:[%s270 + $0x78] sm:$0xf] %v1475
        %1604 = vst [vmem:[%s270 + $0x7c] sm:$0xf] %v1476
        %1605 = vst [vmem:[%s270 + $0x80] sm:$0xf] %v1477
        %1606 = vst [vmem:[%s270 + $0x84] sm:$0xf] %v1478
        %1607 = vst [vmem:[%s270 + $0x88] sm:$0xf] %v1479
        %1608 = vst [vmem:[%s270 + $0x8c] sm:$0xf] %v1480
        %1609 = vst [vmem:[%s270 + $0x90] sm:$0xf] %v1481
        %1610 = vst [vmem:[%s270 + $0x94] sm:$0xf] %v1482
        %1611 = vst [vmem:[%s270 + $0x98] sm:$0xf] %v1483
        %1612 = vst [vmem:[%s270 + $0x9c] sm:$0xf] %v1484
        %1613 = vst [vmem:[%s270 + $0xa0] sm:$0xf] %v1485
        %1614 = vst [vmem:[%s270 + $0xa4] sm:$0xf] %v1486
        %1615 = vst [vmem:[%s270 + $0xa8] sm:$0xf] %v1487
        %1616 = vst [vmem:[%s270 + $0xac] sm:$0xf] %v1488
        %1617 = vst [vmem:[%s270 + $0xb0] sm:$0xf] %v1489
        %1618 = vst [vmem:[%s270 + $0xb4] sm:$0xf] %v1490
        %1619 = vst [vmem:[%s270 + $0xb8] sm:$0xf] %v1491
        %1620 = vst [vmem:[%s270 + $0xbc] sm:$0xf] %v1492
        %1621 = vst [vmem:[%s270 + $0xc0] sm:$0xf] %v1493
        %1622 = vst [vmem:[%s270 + $0xc4] sm:$0xf] %v1494
        %1623 = vst [vmem:[%s270 + $0xc8] sm:$0xf] %v1495
        %1624 = vst [vmem:[%s270 + $0xcc] sm:$0xf] %v1496
        %1625 = vst [vmem:[%s270 + $0xd0] sm:$0xf] %v1497
        %1626 = vst [vmem:[%s270 + $0xd4] sm:$0xf] %v1498
        %1627 = vst [vmem:[%s270 + $0xd8] sm:$0xf] %v1499
        %1628 = vst [vmem:[%s270 + $0xdc] sm:$0xf] %v1500
        %1629 = vst [vmem:[%s270 + $0xe0] sm:$0xf] %v1501
        %1630 = vst [vmem:[%s270 + $0xe4] sm:$0xf] %v1502
        %1631 = vst [vmem:[%s270 + $0xe8] sm:$0xf] %v1503
        %1632 = vst [vmem:[%s270 + $0xec] sm:$0xf] %v1504
        %1633 = vst [vmem:[%s270 + $0xf0] sm:$0xf] %v1505
        %1634 = vst [vmem:[%s270 + $0xf4] sm:$0xf] %v1506
        %1635 = vst [vmem:[%s270 + $0xf8] sm:$0xf] %v1507
        %1636 = vst [vmem:[%s270 + $0xfc] sm:$0xf] %v1508
        %s1637 = sand.u32 %s167, 1
        %s1638 = scalar_lea.sflag [#allocation4], %s1637
        %s1639 = sand.u32 %s167, 1
        %s1640 = smul.addr %s1639, 256
        %s1641 = scalar_lea.vmem [#allocation3], %s1640
        // Predicated region
        $region41: #{tpu_custom_call.1} parent=39 // pred_check
          %p1642 = pneg %p177
        $region42: #{tpu_custom_call.1} parent=39 // pred_check_branch
          %1644 = sbr.rel (%p1642) target = $region44
        $region43: #{tpu_custom_call.1} parent=39 // pred_region
          %s1645 = smul.u32 64, %s25
          %s1647 = ssub.s32 4096, 4096
          %1648 = vsyncadd %s1638, %s1647
          %s1649 = sadd.s32 %s24, %s1645
          %s1650 = smul.addr %s1649, 64
          %s1651 = scalar_lea.hbm %s5, %s1650
          %s1652 = sshll.u32 %s1641, 4
          %s1653 = int_to_ptr.vmem [resolvable:$true] %s1652
          %1658 = dma.vmem_to_hbm [thread:$0]  %s1653, 4096, %s1651, %s1638, 64, 64, 4
        $region44: #{tpu_custom_call.1} parent=39 // pred_fallthru
          _
      $region40: #{tpu_custom_call.1} parent=5 // pred_fallthru
        _
      %p1659 = scmp.le.s32.totalorder 2, %s15
      // Predicated region
      $region45: #{tpu_custom_call.1} parent=5 // pred_check
        %p1660 = pneg %p1659
      $region46: #{tpu_custom_call.1} parent=5 // pred_check_branch
        %1662 = sbr.rel (%p1660) target = $region48
      $region47: #{tpu_custom_call.1} parent=5 // pred_region
        %s1663 = ssub.s32 %s15, 2
        // Predicated region
        $region49: #{tpu_custom_call.1} parent=47 // pred_check
          %p1664 = pneg %p183
        $region50: #{tpu_custom_call.1} parent=47 // pred_check_branch
          %1666 = sbr.rel (%p1664) target = $region52
        $region51: #{tpu_custom_call.1} parent=47 // pred_region
          %s1667 = sand.u32 %s168, 1
          %s1668 = scalar_lea.sflag [#allocation4], %s1667
          %s1669 = sand.u32 %s168, 1
          %s1670 = smul.addr %s1669, 256
          %s1671 = scalar_lea.vmem [#allocation3], %s1670
          %1672 = dma.done %s1668, 4096
        $region52: #{tpu_custom_call.1} parent=47 // pred_fallthru
          _
      $region48: #{tpu_custom_call.1} parent=5 // pred_fallthru
        _
    $region6: #{tpu_custom_call.1} parent=1 // loop_footer
      %s19 = sadd.s32 1, %s15
    $region7: #{tpu_custom_call.1} parent=1 // loop_footer_branch
      %14 = sbr.rel target = $region3
    $region8: #{tpu_custom_call.1} parent=1 // loop_exit
      _
    %1673 = vsyncpa [#allocation4], 1
    %s1674 = scalar_lea.sflag [#allocation4], 1
    %1675 = vsyncpa %s1674, 1

</llo_original>
